<compile_context>
chip_gen: v6e
topology: v6e:2x2x1
jax: 0.10.0
libtpu: 0.0.40
codegen_flags: <defaults>
</compile_context>

<pallas_src>
import numpy as np
import jax
import jax.numpy as jnp
from jax import lax
from jax.experimental import pallas as pl
from jax.experimental.pallas import tpu as pltpu

# ---------------- configuration (the `args` of the PyTorch module) ----------------
EMBED_NUM   = 100   # args.embed_num (vocab size)
EMBED_DIM   = 32    # args.embed_dim
MASK_HIDDEN = 32    # args.mask_hidden_dim
LSTM_HIDDEN = 32    # args.lstm_hidden_dim (num_layers = 1)
CLASS_NUM   = 4     # args.class_num
BATCH       = 2
SEQ         = 8     # args.max_sent_len
# args.activation = 'tanh'; args.dropout irrelevant in eval mode.

LANE = 128
def _slab(n):  # round a column count up to a 128-lane slab (keeps packed slices lane-aligned)
    return ((n + LANE - 1) // LANE) * LANE


# ------------------------------- full forward (glue) -------------------------------
def mask_lstm_forward(tokens, params):
    B, S = tokens.shape
    V, E = params["embed"].shape
    Hm = params["vmask_w1"].shape[1]
    H = params["w_hh"].shape[1]
    C = params["w_label"].shape[0]
    SB = S * B
    R = max(E, H)   # shared row count of the packed bf16 weight block (E == H == 32 here)

    # ---- packed-operand layout (lane-aligned static offsets, captured by the kernel) ----
    W1_OFF  = 0
    WIH_OFF = W1_OFF  + _slab(Hm)
    WHH_OFF = WIH_OFF + _slab(4 * H)
    WL_OFF  = WHH_OFF + _slab(4 * H)
    WCOLS   = WL_OFF  + _slab(C)

    B1_OFF   = 0
    W2D_OFF  = B1_OFF   + _slab(Hm)
    BIAS_OFF = W2D_OFF  + _slab(Hm)
    BL_OFF   = BIAS_OFF + _slab(4 * H)
    B2D_OFF  = BL_OFF   + _slab(C)
    BCOLS    = B2D_OFF  + LANE

    # ---- host-side packing (all MXU operands pre-cast to bf16; biases stay f32) ----
    w2 = params["vmask_w2"]
    b2 = params["vmask_b2"]

    w_pack = jnp.zeros((R, WCOLS), jnp.bfloat16)
    w_pack = w_pack.at[:E, W1_OFF:W1_OFF + Hm].set(params["vmask_w1"].astype(jnp.bfloat16))
    w_pack = w_pack.at[:E, WIH_OFF:WIH_OFF + 4 * H].set(params["w_ih"].T.astype(jnp.bfloat16))
    w_pack = w_pack.at[:H, WHH_OFF:WHH_OFF + 4 * H].set(params["w_hh"].T.astype(jnp.bfloat16))
    w_pack = w_pack.at[:H, WL_OFF:WL_OFF + C].set(params["w_label"].T.astype(jnp.bfloat16))

    b_pack = jnp.zeros((1, BCOLS), jnp.float32)
    b_pack = b_pack.at[0, B1_OFF:B1_OFF + Hm].set(params["vmask_b1"])
    b_pack = b_pack.at[0, W2D_OFF:W2D_OFF + Hm].set(w2[:, 1] - w2[:, 0])      # hidden2p col diff
    b_pack = b_pack.at[0, BIAS_OFF:BIAS_OFF + 4 * H].set(params["b_ih"] + params["b_hh"])
    b_pack = b_pack.at[0, BL_OFF:BL_OFF + C].set(params["b_label"])
    b_pack = b_pack.at[0, B2D_OFF].set(b2[1] - b2[0])                         # hidden2p bias diff

    # x = batch.text.t() -> (seq, batch); flatten time-major so rows [t*B:(t+1)*B] are timestep t
    ids = tokens.T.reshape(SB).astype(jnp.int32)   # SMEM scalar-prefetch operand

    # --------------------------- fused forward kernel ----------------------------------
    def fused_mask_lstm_kernel(ids_ref, embed_ref, w_ref, b_ref, out_ref, x_scratch):
        # ---- embedding lookup: scalar-driven row gather into a VMEM scratch (exact f32) ----
        for r in range(SB):
            tok = ids_ref[r]                                           # SMEM scalar read
            x_scratch[r:r + 1, :] = embed_ref[pl.ds(tok, 1), :]        # dynamic row read
        x = x_scratch[...]                                             # (S*B, E) f32

        # ---- static slices of the packed operands (loaded once, live in vregs) ----
        w1   = w_ref[0:E, W1_OFF:W1_OFF + Hm]                          # (E, Hm)  bf16
        wih  = w_ref[0:E, WIH_OFF:WIH_OFF + 4 * H]                     # (E, 4H)  bf16
        whh  = w_ref[0:H, WHH_OFF:WHH_OFF + 4 * H]                     # (H, 4H)  bf16
        wl   = w_ref[0:H, WL_OFF:WL_OFF + C]                           # (H, C)   bf16
        b1   = b_ref[:, B1_OFF:B1_OFF + Hm]                            # (1, Hm)  f32
        w2d  = b_ref[:, W2D_OFF:W2D_OFF + Hm]                          # (1, Hm)  f32
        bias = b_ref[:, BIAS_OFF:BIAS_OFF + 4 * H]                     # (1, 4H)  f32
        bl   = b_ref[:, BL_OFF:BL_OFF + C]                             # (1, C)   f32
        b2d  = b_ref[:, B2D_OFF:B2D_OFF + 1]                           # (1, 1)   f32

        # ---- VMASK (eval branch): prob_pos = softmax(p)[:, 1] == sigmoid(p1 - p0) ----
        h_m = jnp.tanh(jnp.dot(x.astype(jnp.bfloat16), w1,
                               preferred_element_type=jnp.float32) + b1)        # (S*B, Hm)
        logit_diff = jnp.sum(h_m * w2d, axis=-1, keepdims=True) + b2d           # (S*B, 1)
        prob_pos = 0.5 * (1.0 + jnp.tanh(0.5 * logit_diff))                     # sigmoid via 1 tanh
        x_prime = prob_pos * x                                                  # (S*B, E) f32

        # ---- input-to-hidden projection hoisted out of the recurrence (one MXU matmul) ----
        gx = jnp.dot(x_prime.astype(jnp.bfloat16), wih,
                     preferred_element_type=jnp.float32) + bias                 # (S*B, 4H) [i,f,g,o]

        # hoisted lane-masked constants: single tanh realizes both tanh(g) and sigmoid(i,f,o)
        lane = lax.broadcasted_iota(jnp.int32, (B, 4 * H), 1)
        is_g = (lane >= 2 * H) & (lane < 3 * H)
        pre    = jnp.where(is_g, 1.0, 0.5)      # scale before tanh (x/2 on sigmoid lanes)
        post_a = jnp.where(is_g, 0.0, 0.5)      # affine after tanh (0.5*t + 0.5 on sigmoid lanes)

        h = jnp.zeros((B, H), jnp.float32)
        c = jnp.zeros((B, H), jnp.float32)
        mx = jnp.full((B, H), -jnp.inf, jnp.float32)   # running max over raw h (tanh monotone)

        # fully unrolled time loop; static indices, state stays in vregs
        # TODO(synk): W_hh is loop-invariant; if the bundle dump shows Mosaic re-pushing the RHS
        # every step, switch to pltpu.matmul_push_rhs / matmul_acc_lhs to keep it MXU-stationary.
        for t in range(S):
            gates = gx[t * B:(t + 1) * B, :] + jnp.dot(
                h.astype(jnp.bfloat16), whh, preferred_element_type=jnp.float32)   # (B, 4H)
            t_act = jnp.tanh(gates * pre)           # single EUP pass over the whole slab
            act = t_act * pre + post_a              # sigmoid(i,f,o) / tanh(g) recovered per lane
            i_g = act[:, 0 * H:1 * H]
            f_g = act[:, 1 * H:2 * H]
            g_g = act[:, 2 * H:3 * H]
            o_g = act[:, 3 * H:4 * H]
            c = f_g * c + i_g * g_g
            h = o_g * jnp.tanh(c)
            mx = jnp.maximum(mx, h)                 # max over raw h; tanh applied once after loop

        # ---- tanh(max_pool(tanh(h))) == tanh(tanh(max(h))) -> hidden2label -> softmax ----
        pooled = jnp.tanh(jnp.tanh(mx))                                          # (B, H)
        logits = jnp.dot(pooled.astype(jnp.bfloat16), wl,
                         preferred_element_type=jnp.float32) + bl                # (B, C)
        m = jnp.max(logits, axis=1, keepdims=True)
        e = jnp.exp(logits - m)
        out_ref[...] = (e / jnp.sum(e, axis=1, keepdims=True)).astype(out_ref.dtype)

    # advisory cost hint so XLA doesn't serialize around this tiny custom call
    flops = (2 * SB * E * Hm) + (2 * SB * E * 4 * H) + (S * 2 * B * H * 4 * H) + (2 * B * H * C)
    transcendentals = SB * Hm + SB + S * (B * 4 * H + B * H) + 2 * B * H + B * C
    bytes_accessed = V * E * 4 + R * WCOLS * 2 + BCOLS * 4 + SB * 4 + B * C * 4
    cost = pl.CostEstimate(flops=flops, transcendentals=transcendentals,
                           bytes_accessed=bytes_accessed)

    out = pl.pallas_call(
        fused_mask_lstm_kernel,
        out_shape=jax.ShapeDtypeStruct((B, C), jnp.float32),
        grid_spec=pltpu.PrefetchScalarGridSpec(
            num_scalar_prefetch=1,                       # ids -> SMEM, feeds the gather
            grid=(1,),
            in_specs=[
                pl.BlockSpec((V, E), lambda i, ids: (0, 0)),          # embedding table (f32)
                pl.BlockSpec((R, WCOLS), lambda i, ids: (0, 0)),      # packed bf16 weights
                pl.BlockSpec((1, BCOLS), lambda i, ids: (0, 0)),      # packed f32 biases
            ],
            out_specs=pl.BlockSpec((B, C), lambda i, ids: (0, 0)),
            scratch_shapes=[pltpu.VMEM((SB, E), jnp.float32)],        # gathered x
        ),
        compiler_params=pltpu.CompilerParams(dimension_semantics=("arbitrary",)),
        cost_estimate=cost,
    )(ids, params["embed"], w_pack, b_pack)
    # TODO(synk): self.infor_loss (entropy-like side attribute) and the train-mode
    # gumbel_softmax branch are not part of the returned output and are not computed here.
    # TODO(synk): at production batch sizes, add a leading "parallel" grid axis over batch
    # tiles so v7x shards the work across both TensorCores; at B=2 a single program is optimal.
    return out


# ---------------------------- pure-JAX reference -----------------------------------
def reference_forward(tokens, params):
    x_ids = tokens.T
    embed = params["embed"][x_ids]                                       # (S, B, E)
    h = jnp.tanh(embed @ params["vmask_w1"] + params["vmask_b1"])
    p = h @ params["vmask_w2"] + params["vmask_b2"]                      # (S, B, 2)
    probs = jax.nn.softmax(p, axis=2)[:, :, 1:2]
    xp = probs * embed

    H = LSTM_HIDDEN
    wih_t = params["w_ih"].T
    whh_t = params["w_hh"].T
    bias = params["b_ih"] + params["b_hh"]
    B = tokens.shape[0]

    def step(carry, xt):
        h_prev, c_prev = carry
        gates = xt @ wih_t + h_prev @ whh_t + bias
        i = jax.nn.sigmoid(gates[:, 0 * H:1 * H])
        f = jax.nn.sigmoid(gates[:, 1 * H:2 * H])
        g = jnp.tanh(gates[:, 2 * H:3 * H])
        o = jax.nn.sigmoid(gates[:, 3 * H:4 * H])
        c = f * c_prev + i * g
        hh = o * jnp.tanh(c)
        return (hh, c), hh

    init = (jnp.zeros((B, H), jnp.float32), jnp.zeros((B, H), jnp.float32))
    _, hs = lax.scan(step, init, xp)                                     # (S, B, H)
    pooled = jnp.tanh(jnp.max(jnp.tanh(hs), axis=0))                     # (B, H)
    logits = pooled @ params["w_label"].T + params["b_label"]
    return jax.nn.softmax(logits, axis=1)


# ------------------------------------- main ----------------------------------------
if __name__ == "__main__":
    key = jax.random.PRNGKey(0)
    ks = jax.random.split(key, 12)

    emb = jax.random.normal(ks[0], (EMBED_NUM, EMBED_DIM), jnp.float32) * 0.5
    emb = emb.at[0].set(jax.random.uniform(ks[1], (EMBED_DIM,), jnp.float32, -0.05, 0.05))
    emb = emb.at[1].set(0.0)  # padding_idx = 1

    params = {
        "embed":    emb,
        "vmask_w1": jax.random.normal(ks[2], (EMBED_DIM, MASK_HIDDEN), jnp.float32) * 0.2,
        "vmask_b1": jax.random.normal(ks[3], (MASK_HIDDEN,), jnp.float32) * 0.1,
        "vmask_w2": jax.random.normal(ks[4], (MASK_HIDDEN, 2), jnp.float32) * 0.2,
        "vmask_b2": jax.random.normal(ks[5], (2,), jnp.float32) * 0.1,
        # PyTorch nn.LSTM layouts: weight_ih_l0 (4H, E), weight_hh_l0 (4H, H), gate order [i,f,g,o]
        "w_ih":     jax.random.normal(ks[6], (4 * LSTM_HIDDEN, EMBED_DIM), jnp.float32) * 0.2,
        "w_hh":     jax.random.normal(ks[7], (4 * LSTM_HIDDEN, LSTM_HIDDEN), jnp.float32) * 0.2,
        "b_ih":     jax.random.normal(ks[8], (4 * LSTM_HIDDEN,), jnp.float32) * 0.1,
        "b_hh":     jax.random.normal(ks[9], (4 * LSTM_HIDDEN,), jnp.float32) * 0.1,
        # nn.Linear(H, C): weight (C, H), bias (C,)
        "w_label":  jax.random.normal(ks[10], (CLASS_NUM, LSTM_HIDDEN), jnp.float32) * 0.2,
        "b_label":  jax.random.normal(ks[11], (CLASS_NUM,), jnp.float32) * 0.1,
    }

    tokens = jax.random.randint(jax.random.PRNGKey(42), (BATCH, SEQ), 0, EMBED_NUM, jnp.int32)

    out = mask_lstm_forward(tokens, params)
    out = jax.block_until_ready(out)

    ref = reference_forward(tokens, params)
    # bf16 MXU operands with f32 accumulation -> slightly looser tolerance than pure f32
    np.testing.assert_allclose(np.asarray(out), np.asarray(ref), rtol=2e-2, atol=2e-2)
    assert out.shape == (BATCH, CLASS_NUM)
    assert bool(jnp.all(jnp.isfinite(out)))

    print("KERNEL_OK")
</pallas_src>

<mosaic_0001>
module attributes {stable_mosaic.version = 11 : i64} {
  func.func @fused_mask_lstm_kernel(%arg0: i32, %arg1: memref<16xi32, #tpu.memory_space<smem>>, %arg2: memref<100x32xf32, #tpu.memory_space<vmem>>, %arg3: memref<32x512xbf16, #tpu.memory_space<vmem>>, %arg4: memref<1x640xf32, #tpu.memory_space<vmem>>, %arg5: memref<2x4xf32, #tpu.memory_space<vmem>>, %arg6: memref<16x32xf32, #tpu.memory_space<vmem>>) attributes {dimension_semantics = [#tpu.dimension_semantics<arbitrary>], iteration_bounds = array<i64: 1>, scalar_prefetch = 1 : i64, scratch_operands = 1 : i64, tpu.core_type = #tpu.core_type<tc>, window_params = [{pipeline_mode = #tpu.pipeline_mode<synchronous>, transform_indices = @transform_0, window_bounds = array<i64: 100, 32>}, {pipeline_mode = #tpu.pipeline_mode<synchronous>, transform_indices = @transform_1, window_bounds = array<i64: 32, 512>}, {pipeline_mode = #tpu.pipeline_mode<synchronous>, transform_indices = @transform_2, window_bounds = array<i64: 1, 640>}, {pipeline_mode = #tpu.pipeline_mode<synchronous>, transform_indices = @transform_3, window_bounds = array<i64: 2, 4>}]} {
    %c0 = arith.constant 0 : index
    %0 = memref.load %arg1[%c0] : memref<16xi32, #tpu.memory_space<smem>>
    %1 = arith.index_cast %0 : i32 to index
    %c0_0 = arith.constant 0 : index
    %2 = vector.load %arg2[%1, %c0_0] : memref<100x32xf32, #tpu.memory_space<vmem>>, vector<1x32xf32>
    %c0_1 = arith.constant 0 : index
    %c0_2 = arith.constant 0 : index
    %3 = vector.load %arg6[%c0_1, %c0_2] : memref<16x32xf32, #tpu.memory_space<vmem>>, vector<1x32xf32>
    tpu.vector_store %arg6[%c0_1, %c0_2], %2 {strides = array<i32>} : memref<16x32xf32, #tpu.memory_space<vmem>>, vector<1x32xf32>,
    %c1 = arith.constant 1 : index
    %4 = memref.load %arg1[%c1] : memref<16xi32, #tpu.memory_space<smem>>
    %5 = arith.index_cast %4 : i32 to index
    %c0_3 = arith.constant 0 : index
    %6 = vector.load %arg2[%5, %c0_3] : memref<100x32xf32, #tpu.memory_space<vmem>>, vector<1x32xf32>
    %c1_4 = arith.constant 1 : index
    %c0_5 = arith.constant 0 : index
    %7 = vector.load %arg6[%c1_4, %c0_5] : memref<16x32xf32, #tpu.memory_space<vmem>>, vector<1x32xf32>
    tpu.vector_store %arg6[%c1_4, %c0_5], %6 {strides = array<i32>} : memref<16x32xf32, #tpu.memory_space<vmem>>, vector<1x32xf32>,
    %c2 = arith.constant 2 : index
    %8 = memref.load %arg1[%c2] : memref<16xi32, #tpu.memory_space<smem>>
    %9 = arith.index_cast %8 : i32 to index
    %c0_6 = arith.constant 0 : index
    %10 = vector.load %arg2[%9, %c0_6] : memref<100x32xf32, #tpu.memory_space<vmem>>, vector<1x32xf32>
    %c2_7 = arith.constant 2 : index
    %c0_8 = arith.constant 0 : index
    %11 = vector.load %arg6[%c2_7, %c0_8] : memref<16x32xf32, #tpu.memory_space<vmem>>, vector<1x32xf32>
    tpu.vector_store %arg6[%c2_7, %c0_8], %10 {strides = array<i32>} : memref<16x32xf32, #tpu.memory_space<vmem>>, vector<1x32xf32>,
    %c3 = arith.constant 3 : index
    %12 = memref.load %arg1[%c3] : memref<16xi32, #tpu.memory_space<smem>>
    %13 = arith.index_cast %12 : i32 to index
    %c0_9 = arith.constant 0 : index
    %14 = vector.load %arg2[%13, %c0_9] : memref<100x32xf32, #tpu.memory_space<vmem>>, vector<1x32xf32>
    %c3_10 = arith.constant 3 : index
    %c0_11 = arith.constant 0 : index
    %15 = vector.load %arg6[%c3_10, %c0_11] : memref<16x32xf32, #tpu.memory_space<vmem>>, vector<1x32xf32>
    tpu.vector_store %arg6[%c3_10, %c0_11], %14 {strides = array<i32>} : memref<16x32xf32, #tpu.memory_space<vmem>>, vector<1x32xf32>,
    %c4 = arith.constant 4 : index
    %16 = memref.load %arg1[%c4] : memref<16xi32, #tpu.memory_space<smem>>
    %17 = arith.index_cast %16 : i32 to index
    %c0_12 = arith.constant 0 : index
    %18 = vector.load %arg2[%17, %c0_12] : memref<100x32xf32, #tpu.memory_space<vmem>>, vector<1x32xf32>
    %c4_13 = arith.constant 4 : index
    %c0_14 = arith.constant 0 : index
    %19 = vector.load %arg6[%c4_13, %c0_14] : memref<16x32xf32, #tpu.memory_space<vmem>>, vector<1x32xf32>
    tpu.vector_store %arg6[%c4_13, %c0_14], %18 {strides = array<i32>} : memref<16x32xf32, #tpu.memory_space<vmem>>, vector<1x32xf32>,
    %c5 = arith.constant 5 : index
    %20 = memref.load %arg1[%c5] : memref<16xi32, #tpu.memory_space<smem>>
    %21 = arith.index_cast %20 : i32 to index
    %c0_15 = arith.constant 0 : index
    %22 = vector.load %arg2[%21, %c0_15] : memref<100x32xf32, #tpu.memory_space<vmem>>, vector<1x32xf32>
    %c5_16 = arith.constant 5 : index
    %c0_17 = arith.constant 0 : index
    %23 = vector.load %arg6[%c5_16, %c0_17] : memref<16x32xf32, #tpu.memory_space<vmem>>, vector<1x32xf32>
    tpu.vector_store %arg6[%c5_16, %c0_17], %22 {strides = array<i32>} : memref<16x32xf32, #tpu.memory_space<vmem>>, vector<1x32xf32>,
    %c6 = arith.constant 6 : index
    %24 = memref.load %arg1[%c6] : memref<16xi32, #tpu.memory_space<smem>>
    %25 = arith.index_cast %24 : i32 to index
    %c0_18 = arith.constant 0 : index
    %26 = vector.load %arg2[%25, %c0_18] : memref<100x32xf32, #tpu.memory_space<vmem>>, vector<1x32xf32>
    %c6_19 = arith.constant 6 : index
    %c0_20 = arith.constant 0 : index
    %27 = vector.load %arg6[%c6_19, %c0_20] : memref<16x32xf32, #tpu.memory_space<vmem>>, vector<1x32xf32>
    tpu.vector_store %arg6[%c6_19, %c0_20], %26 {strides = array<i32>} : memref<16x32xf32, #tpu.memory_space<vmem>>, vector<1x32xf32>,
    %c7 = arith.constant 7 : index
    %28 = memref.load %arg1[%c7] : memref<16xi32, #tpu.memory_space<smem>>
    %29 = arith.index_cast %28 : i32 to index
    %c0_21 = arith.constant 0 : index
    %30 = vector.load %arg2[%29, %c0_21] : memref<100x32xf32, #tpu.memory_space<vmem>>, vector<1x32xf32>
    %c7_22 = arith.constant 7 : index
    %c0_23 = arith.constant 0 : index
    %31 = vector.load %arg6[%c7_22, %c0_23] : memref<16x32xf32, #tpu.memory_space<vmem>>, vector<1x32xf32>
    tpu.vector_store %arg6[%c7_22, %c0_23], %30 {strides = array<i32>} : memref<16x32xf32, #tpu.memory_space<vmem>>, vector<1x32xf32>,
    %c8 = arith.constant 8 : index
    %32 = memref.load %arg1[%c8] : memref<16xi32, #tpu.memory_space<smem>>
    %33 = arith.index_cast %32 : i32 to index
    %c0_24 = arith.constant 0 : index
    %34 = vector.load %arg2[%33, %c0_24] : memref<100x32xf32, #tpu.memory_space<vmem>>, vector<1x32xf32>
    %c8_25 = arith.constant 8 : index
    %c0_26 = arith.constant 0 : index
    %35 = vector.load %arg6[%c8_25, %c0_26] : memref<16x32xf32, #tpu.memory_space<vmem>>, vector<1x32xf32>
    tpu.vector_store %arg6[%c8_25, %c0_26], %34 {strides = array<i32>} : memref<16x32xf32, #tpu.memory_space<vmem>>, vector<1x32xf32>,
    %c9 = arith.constant 9 : index
    %36 = memref.load %arg1[%c9] : memref<16xi32, #tpu.memory_space<smem>>
    %37 = arith.index_cast %36 : i32 to index
    %c0_27 = arith.constant 0 : index
    %38 = vector.load %arg2[%37, %c0_27] : memref<100x32xf32, #tpu.memory_space<vmem>>, vector<1x32xf32>
    %c9_28 = arith.constant 9 : index
    %c0_29 = arith.constant 0 : index
    %39 = vector.load %arg6[%c9_28, %c0_29] : memref<16x32xf32, #tpu.memory_space<vmem>>, vector<1x32xf32>
    tpu.vector_store %arg6[%c9_28, %c0_29], %38 {strides = array<i32>} : memref<16x32xf32, #tpu.memory_space<vmem>>, vector<1x32xf32>,
    %c10 = arith.constant 10 : index
    %40 = memref.load %arg1[%c10] : memref<16xi32, #tpu.memory_space<smem>>
    %41 = arith.index_cast %40 : i32 to index
    %c0_30 = arith.constant 0 : index
    %42 = vector.load %arg2[%41, %c0_30] : memref<100x32xf32, #tpu.memory_space<vmem>>, vector<1x32xf32>
    %c10_31 = arith.constant 10 : index
    %c0_32 = arith.constant 0 : index
    %43 = vector.load %arg6[%c10_31, %c0_32] : memref<16x32xf32, #tpu.memory_space<vmem>>, vector<1x32xf32>
    tpu.vector_store %arg6[%c10_31, %c0_32], %42 {strides = array<i32>} : memref<16x32xf32, #tpu.memory_space<vmem>>, vector<1x32xf32>,
    %c11 = arith.constant 11 : index
    %44 = memref.load %arg1[%c11] : memref<16xi32, #tpu.memory_space<smem>>
    %45 = arith.index_cast %44 : i32 to index
    %c0_33 = arith.constant 0 : index
    %46 = vector.load %arg2[%45, %c0_33] : memref<100x32xf32, #tpu.memory_space<vmem>>, vector<1x32xf32>
    %c11_34 = arith.constant 11 : index
    %c0_35 = arith.constant 0 : index
    %47 = vector.load %arg6[%c11_34, %c0_35] : memref<16x32xf32, #tpu.memory_space<vmem>>, vector<1x32xf32>
    tpu.vector_store %arg6[%c11_34, %c0_35], %46 {strides = array<i32>} : memref<16x32xf32, #tpu.memory_space<vmem>>, vector<1x32xf32>,
    %c12 = arith.constant 12 : index
    %48 = memref.load %arg1[%c12] : memref<16xi32, #tpu.memory_space<smem>>
    %49 = arith.index_cast %48 : i32 to index
    %c0_36 = arith.constant 0 : index
    %50 = vector.load %arg2[%49, %c0_36] : memref<100x32xf32, #tpu.memory_space<vmem>>, vector<1x32xf32>
    %c12_37 = arith.constant 12 : index
    %c0_38 = arith.constant 0 : index
    %51 = vector.load %arg6[%c12_37, %c0_38] : memref<16x32xf32, #tpu.memory_space<vmem>>, vector<1x32xf32>
    tpu.vector_store %arg6[%c12_37, %c0_38], %50 {strides = array<i32>} : memref<16x32xf32, #tpu.memory_space<vmem>>, vector<1x32xf32>,
    %c13 = arith.constant 13 : index
    %52 = memref.load %arg1[%c13] : memref<16xi32, #tpu.memory_space<smem>>
    %53 = arith.index_cast %52 : i32 to index
    %c0_39 = arith.constant 0 : index
    %54 = vector.load %arg2[%53, %c0_39] : memref<100x32xf32, #tpu.memory_space<vmem>>, vector<1x32xf32>
    %c13_40 = arith.constant 13 : index
    %c0_41 = arith.constant 0 : index
    %55 = vector.load %arg6[%c13_40, %c0_41] : memref<16x32xf32, #tpu.memory_space<vmem>>, vector<1x32xf32>
    tpu.vector_store %arg6[%c13_40, %c0_41], %54 {strides = array<i32>} : memref<16x32xf32, #tpu.memory_space<vmem>>, vector<1x32xf32>,
    %c14 = arith.constant 14 : index
    %56 = memref.load %arg1[%c14] : memref<16xi32, #tpu.memory_space<smem>>
    %57 = arith.index_cast %56 : i32 to index
    %c0_42 = arith.constant 0 : index
    %58 = vector.load %arg2[%57, %c0_42] : memref<100x32xf32, #tpu.memory_space<vmem>>, vector<1x32xf32>
    %c14_43 = arith.constant 14 : index
    %c0_44 = arith.constant 0 : index
    %59 = vector.load %arg6[%c14_43, %c0_44] : memref<16x32xf32, #tpu.memory_space<vmem>>, vector<1x32xf32>
    tpu.vector_store %arg6[%c14_43, %c0_44], %58 {strides = array<i32>} : memref<16x32xf32, #tpu.memory_space<vmem>>, vector<1x32xf32>,
    %c15 = arith.constant 15 : index
    %60 = memref.load %arg1[%c15] : memref<16xi32, #tpu.memory_space<smem>>
    %61 = arith.index_cast %60 : i32 to index
    %c0_45 = arith.constant 0 : index
    %62 = vector.load %arg2[%61, %c0_45] : memref<100x32xf32, #tpu.memory_space<vmem>>, vector<1x32xf32>
    %c15_46 = arith.constant 15 : index
    %c0_47 = arith.constant 0 : index
    %63 = vector.load %arg6[%c15_46, %c0_47] : memref<16x32xf32, #tpu.memory_space<vmem>>, vector<1x32xf32>
    tpu.vector_store %arg6[%c15_46, %c0_47], %62 {strides = array<i32>} : memref<16x32xf32, #tpu.memory_space<vmem>>, vector<1x32xf32>,
    %c0_48 = arith.constant 0 : index
    %c0_49 = arith.constant 0 : index
    %64 = vector.load %arg6[%c0_48, %c0_49] : memref<16x32xf32, #tpu.memory_space<vmem>>, vector<16x32xf32>
    %c0_50 = arith.constant 0 : index
    %c0_51 = arith.constant 0 : index
    %65 = vector.load %arg3[%c0_50, %c0_51] : memref<32x512xbf16, #tpu.memory_space<vmem>>, vector<32x32xbf16>
    %c0_52 = arith.constant 0 : index
    %c128 = arith.constant 128 : index
    %66 = vector.load %arg3[%c0_52, %c128] : memref<32x512xbf16, #tpu.memory_space<vmem>>, vector<32x128xbf16>
    %c0_53 = arith.constant 0 : index
    %c256 = arith.constant 256 : index
    %67 = vector.load %arg3[%c0_53, %c256] : memref<32x512xbf16, #tpu.memory_space<vmem>>, vector<32x128xbf16>
    %c0_54 = arith.constant 0 : index
    %c384 = arith.constant 384 : index
    %68 = vector.load %arg3[%c0_54, %c384] : memref<32x512xbf16, #tpu.memory_space<vmem>>, vector<32x4xbf16>
    %c0_55 = arith.constant 0 : index
    %c0_56 = arith.constant 0 : index
    %69 = vector.load %arg4[%c0_55, %c0_56] : memref<1x640xf32, #tpu.memory_space<vmem>>, vector<1x32xf32>
    %c0_57 = arith.constant 0 : index
    %c128_58 = arith.constant 128 : index
    %70 = vector.load %arg4[%c0_57, %c128_58] : memref<1x640xf32, #tpu.memory_space<vmem>>, vector<1x32xf32>
    %c0_59 = arith.constant 0 : index
    %c256_60 = arith.constant 256 : index
    %71 = vector.load %arg4[%c0_59, %c256_60] : memref<1x640xf32, #tpu.memory_space<vmem>>, vector<1x128xf32>
    %c0_61 = arith.constant 0 : index
    %c384_62 = arith.constant 384 : index
    %72 = vector.load %arg4[%c0_61, %c384_62] : memref<1x640xf32, #tpu.memory_space<vmem>>, vector<1x4xf32>
    %c0_63 = arith.constant 0 : index
    %c512 = arith.constant 512 : index
    %73 = vector.load %arg4[%c0_63, %c512] : memref<1x640xf32, #tpu.memory_space<vmem>>, vector<1x1xf32>
    %74 = arith.truncf %64 : vector<16x32xf32> to vector<16x32xbf16>
    %cst = arith.constant dense<0.000000e+00> : vector<16x32xf32>
    %75 = tpu.matmul %74, %65, %cst {dimension_numbers = #tpu.dot_dimension_numbers<[1], [0], [0], [1], [0, 0, 1, 1], [], []>} : vector<16x32xbf16>, vector<32x32xbf16>, vector<16x32xf32> -> vector<16x32xf32>
    %76 = vector.broadcast %69 : vector<1x32xf32> to vector<16x32xf32>
    %77 = arith.addf %75, %76 : vector<16x32xf32>
    %78 = math.tanh %77 : vector<16x32xf32>
    %79 = vector.broadcast %70 : vector<1x32xf32> to vector<16x32xf32>
    %80 = arith.mulf %78, %79 : vector<16x32xf32>
    %cst_64 = arith.constant dense<0.000000e+00> : vector<16xf32>
    %81 = vector.multi_reduction <add>, %80, %cst_64 [1] : vector<16x32xf32> to vector<16xf32>
    %82 = vector.shape_cast %81 : vector<16xf32> to vector<16x1xf32>
    %83 = vector.broadcast %73 : vector<1x1xf32> to vector<16x1xf32>
    %84 = arith.addf %82, %83 : vector<16x1xf32>
    %cst_65 = arith.constant 5.000000e-01 : f32
    %85 = vector.broadcast %cst_65 : f32 to vector<16x1xf32>
    %86 = arith.mulf %85, %84 : vector<16x1xf32>
    %87 = math.tanh %86 : vector<16x1xf32>
    %cst_66 = arith.constant 1.000000e+00 : f32
    %88 = vector.broadcast %cst_66 : f32 to vector<16x1xf32>
    %89 = arith.addf %88, %87 : vector<16x1xf32>
    %cst_67 = arith.constant 5.000000e-01 : f32
    %90 = vector.broadcast %cst_67 : f32 to vector<16x1xf32>
    %91 = arith.mulf %90, %89 : vector<16x1xf32>
    %92 = vector.broadcast %91 : vector<16x1xf32> to vector<16x32xf32>
    %93 = arith.mulf %92, %64 : vector<16x32xf32>
    %94 = arith.truncf %93 : vector<16x32xf32> to vector<16x32xbf16>
    %cst_68 = arith.constant dense<0.000000e+00> : vector<16x128xf32>
    %95 = tpu.matmul %94, %66, %cst_68 {dimension_numbers = #tpu.dot_dimension_numbers<[1], [0], [0], [1], [0, 0, 1, 1], [], []>} : vector<16x32xbf16>, vector<32x128xbf16>, vector<16x128xf32> -> vector<16x128xf32>
    %96 = vector.broadcast %71 : vector<1x128xf32> to vector<16x128xf32>
    %97 = arith.addf %95, %96 : vector<16x128xf32>
    %98 = tpu.iota {dimensions = array<i32: 1>} : vector<2x128xi32>
    %c64_i32 = arith.constant 64 : i32
    %99 = vector.broadcast %c64_i32 : i32 to vector<2x128xi32>
    %100 = arith.cmpi sge, %98, %99 : vector<2x128xi32>
    %c96_i32 = arith.constant 96 : i32
    %101 = vector.broadcast %c96_i32 : i32 to vector<2x128xi32>
    %102 = arith.cmpi slt, %98, %101 : vector<2x128xi32>
    %103 = arith.andi %100, %102 : vector<2x128xi1>
    %cst_69 = arith.constant 1.000000e+00 : f32
    %cst_70 = arith.constant 5.000000e-01 : f32
    %104 = vector.broadcast %cst_69 : f32 to vector<2x128xf32>
    %105 = vector.broadcast %cst_70 : f32 to vector<2x128xf32>
    %106 = arith.select %103, %104, %105 : vector<2x128xi1>, vector<2x128xf32>
    %cst_71 = arith.constant 0.000000e+00 : f32
    %cst_72 = arith.constant 5.000000e-01 : f32
    %107 = vector.broadcast %cst_71 : f32 to vector<2x128xf32>
    %108 = vector.broadcast %cst_72 : f32 to vector<2x128xf32>
    %109 = arith.select %103, %107, %108 : vector<2x128xi1>, vector<2x128xf32>
    %cst_73 = arith.constant 0.000000e+00 : f32
    %110 = vector.broadcast %cst_73 : f32 to vector<2x32xf32>
    %cst_74 = arith.constant 0.000000e+00 : f32
    %111 = vector.broadcast %cst_74 : f32 to vector<2x32xf32>
    %cst_75 = arith.constant 0xFF800000 : f32
    %112 = vector.broadcast %cst_75 : f32 to vector<2x32xf32>
    %113 = vector.extract_strided_slice %97 {offsets = [0, 0], sizes = [2, 128], strides = [1, 1]} : vector<16x128xf32> to vector<2x128xf32>
    %114 = arith.truncf %110 : vector<2x32xf32> to vector<2x32xbf16>
    %cst_76 = arith.constant dense<0.000000e+00> : vector<2x128xf32>
    %115 = tpu.matmul %114, %67, %cst_76 {dimension_numbers = #tpu.dot_dimension_numbers<[1], [0], [0], [1], [0, 0, 1, 1], [], []>} : vector<2x32xbf16>, vector<32x128xbf16>, vector<2x128xf32> -> vector<2x128xf32>
    %116 = arith.addf %113, %115 : vector<2x128xf32>
    %117 = arith.mulf %116, %106 : vector<2x128xf32>
    %118 = math.tanh %117 : vector<2x128xf32>
    %119 = arith.mulf %118, %106 : vector<2x128xf32>
    %120 = arith.addf %119, %109 : vector<2x128xf32>
    %121 = vector.extract_strided_slice %120 {offsets = [0, 0], sizes = [2, 32], strides = [1, 1]} : vector<2x128xf32> to vector<2x32xf32>
    %122 = vector.extract_strided_slice %120 {offsets = [0, 32], sizes = [2, 32], strides = [1, 1]} : vector<2x128xf32> to vector<2x32xf32>
    %123 = vector.extract_strided_slice %120 {offsets = [0, 64], sizes = [2, 32], strides = [1, 1]} : vector<2x128xf32> to vector<2x32xf32>
    %124 = vector.extract_strided_slice %120 {offsets = [0, 96], sizes = [2, 32], strides = [1, 1]} : vector<2x128xf32> to vector<2x32xf32>
    %125 = arith.mulf %122, %111 : vector<2x32xf32>
    %126 = arith.mulf %121, %123 : vector<2x32xf32>
    %127 = arith.addf %125, %126 : vector<2x32xf32>
    %128 = math.tanh %127 : vector<2x32xf32>
    %129 = arith.mulf %124, %128 : vector<2x32xf32>
    %130 = arith.maximumf %112, %129 : vector<2x32xf32>
    %131 = vector.extract_strided_slice %97 {offsets = [2, 0], sizes = [2, 128], strides = [1, 1]} : vector<16x128xf32> to vector<2x128xf32>
    %132 = arith.truncf %129 : vector<2x32xf32> to vector<2x32xbf16>
    %cst_77 = arith.constant dense<0.000000e+00> : vector<2x128xf32>
    %133 = tpu.matmul %132, %67, %cst_77 {dimension_numbers = #tpu.dot_dimension_numbers<[1], [0], [0], [1], [0, 0, 1, 1], [], []>} : vector<2x32xbf16>, vector<32x128xbf16>, vector<2x128xf32> -> vector<2x128xf32>
    %134 = arith.addf %131, %133 : vector<2x128xf32>
    %135 = arith.mulf %134, %106 : vector<2x128xf32>
    %136 = math.tanh %135 : vector<2x128xf32>
    %137 = arith.mulf %136, %106 : vector<2x128xf32>
    %138 = arith.addf %137, %109 : vector<2x128xf32>
    %139 = vector.extract_strided_slice %138 {offsets = [0, 0], sizes = [2, 32], strides = [1, 1]} : vector<2x128xf32> to vector<2x32xf32>
    %140 = vector.extract_strided_slice %138 {offsets = [0, 32], sizes = [2, 32], strides = [1, 1]} : vector<2x128xf32> to vector<2x32xf32>
    %141 = vector.extract_strided_slice %138 {offsets = [0, 64], sizes = [2, 32], strides = [1, 1]} : vector<2x128xf32> to vector<2x32xf32>
    %142 = vector.extract_strided_slice %138 {offsets = [0, 96], sizes = [2, 32], strides = [1, 1]} : vector<2x128xf32> to vector<2x32xf32>
    %143 = arith.mulf %140, %127 : vector<2x32xf32>
    %144 = arith.mulf %139, %141 : vector<2x32xf32>
    %145 = arith.addf %143, %144 : vector<2x32xf32>
    %146 = math.tanh %145 : vector<2x32xf32>
    %147 = arith.mulf %142, %146 : vector<2x32xf32>
    %148 = arith.maximumf %130, %147 : vector<2x32xf32>
    %149 = vector.extract_strided_slice %97 {offsets = [4, 0], sizes = [2, 128], strides = [1, 1]} : vector<16x128xf32> to vector<2x128xf32>
    %150 = arith.truncf %147 : vector<2x32xf32> to vector<2x32xbf16>
    %cst_78 = arith.constant dense<0.000000e+00> : vector<2x128xf32>
    %151 = tpu.matmul %150, %67, %cst_78 {dimension_numbers = #tpu.dot_dimension_numbers<[1], [0], [0], [1], [0, 0, 1, 1], [], []>} : vector<2x32xbf16>, vector<32x128xbf16>, vector<2x128xf32> -> vector<2x128xf32>
    %152 = arith.addf %149, %151 : vector<2x128xf32>
    %153 = arith.mulf %152, %106 : vector<2x128xf32>
    %154 = math.tanh %153 : vector<2x128xf32>
    %155 = arith.mulf %154, %106 : vector<2x128xf32>
    %156 = arith.addf %155, %109 : vector<2x128xf32>
    %157 = vector.extract_strided_slice %156 {offsets = [0, 0], sizes = [2, 32], strides = [1, 1]} : vector<2x128xf32> to vector<2x32xf32>
    %158 = vector.extract_strided_slice %156 {offsets = [0, 32], sizes = [2, 32], strides = [1, 1]} : vector<2x128xf32> to vector<2x32xf32>
    %159 = vector.extract_strided_slice %156 {offsets = [0, 64], sizes = [2, 32], strides = [1, 1]} : vector<2x128xf32> to vector<2x32xf32>
    %160 = vector.extract_strided_slice %156 {offsets = [0, 96], sizes = [2, 32], strides = [1, 1]} : vector<2x128xf32> to vector<2x32xf32>
    %161 = arith.mulf %158, %145 : vector<2x32xf32>
    %162 = arith.mulf %157, %159 : vector<2x32xf32>
    %163 = arith.addf %161, %162 : vector<2x32xf32>
    %164 = math.tanh %163 : vector<2x32xf32>
    %165 = arith.mulf %160, %164 : vector<2x32xf32>
    %166 = arith.maximumf %148, %165 : vector<2x32xf32>
    %167 = vector.extract_strided_slice %97 {offsets = [6, 0], sizes = [2, 128], strides = [1, 1]} : vector<16x128xf32> to vector<2x128xf32>
    %168 = arith.truncf %165 : vector<2x32xf32> to vector<2x32xbf16>
    %cst_79 = arith.constant dense<0.000000e+00> : vector<2x128xf32>
    %169 = tpu.matmul %168, %67, %cst_79 {dimension_numbers = #tpu.dot_dimension_numbers<[1], [0], [0], [1], [0, 0, 1, 1], [], []>} : vector<2x32xbf16>, vector<32x128xbf16>, vector<2x128xf32> -> vector<2x128xf32>
    %170 = arith.addf %167, %169 : vector<2x128xf32>
    %171 = arith.mulf %170, %106 : vector<2x128xf32>
    %172 = math.tanh %171 : vector<2x128xf32>
    %173 = arith.mulf %172, %106 : vector<2x128xf32>
    %174 = arith.addf %173, %109 : vector<2x128xf32>
    %175 = vector.extract_strided_slice %174 {offsets = [0, 0], sizes = [2, 32], strides = [1, 1]} : vector<2x128xf32> to vector<2x32xf32>
    %176 = vector.extract_strided_slice %174 {offsets = [0, 32], sizes = [2, 32], strides = [1, 1]} : vector<2x128xf32> to vector<2x32xf32>
    %177 = vector.extract_strided_slice %174 {offsets = [0, 64], sizes = [2, 32], strides = [1, 1]} : vector<2x128xf32> to vector<2x32xf32>
    %178 = vector.extract_strided_slice %174 {offsets = [0, 96], sizes = [2, 32], strides = [1, 1]} : vector<2x128xf32> to vector<2x32xf32>
    %179 = arith.mulf %176, %163 : vector<2x32xf32>
    %180 = arith.mulf %175, %177 : vector<2x32xf32>
    %181 = arith.addf %179, %180 : vector<2x32xf32>
    %182 = math.tanh %181 : vector<2x32xf32>
    %183 = arith.mulf %178, %182 : vector<2x32xf32>
    %184 = arith.maximumf %166, %183 : vector<2x32xf32>
    %185 = vector.extract_strided_slice %97 {offsets = [8, 0], sizes = [2, 128], strides = [1, 1]} : vector<16x128xf32> to vector<2x128xf32>
    %186 = arith.truncf %183 : vector<2x32xf32> to vector<2x32xbf16>
    %cst_80 = arith.constant dense<0.000000e+00> : vector<2x128xf32>
    %187 = tpu.matmul %186, %67, %cst_80 {dimension_numbers = #tpu.dot_dimension_numbers<[1], [0], [0], [1], [0, 0, 1, 1], [], []>} : vector<2x32xbf16>, vector<32x128xbf16>, vector<2x128xf32> -> vector<2x128xf32>
    %188 = arith.addf %185, %187 : vector<2x128xf32>
    %189 = arith.mulf %188, %106 : vector<2x128xf32>
    %190 = math.tanh %189 : vector<2x128xf32>
    %191 = arith.mulf %190, %106 : vector<2x128xf32>
    %192 = arith.addf %191, %109 : vector<2x128xf32>
    %193 = vector.extract_strided_slice %192 {offsets = [0, 0], sizes = [2, 32], strides = [1, 1]} : vector<2x128xf32> to vector<2x32xf32>
    %194 = vector.extract_strided_slice %192 {offsets = [0, 32], sizes = [2, 32], strides = [1, 1]} : vector<2x128xf32> to vector<2x32xf32>
    %195 = vector.extract_strided_slice %192 {offsets = [0, 64], sizes = [2, 32], strides = [1, 1]} : vector<2x128xf32> to vector<2x32xf32>
    %196 = vector.extract_strided_slice %192 {offsets = [0, 96], sizes = [2, 32], strides = [1, 1]} : vector<2x128xf32> to vector<2x32xf32>
    %197 = arith.mulf %194, %181 : vector<2x32xf32>
    %198 = arith.mulf %193, %195 : vector<2x32xf32>
    %199 = arith.addf %197, %198 : vector<2x32xf32>
    %200 = math.tanh %199 : vector<2x32xf32>
    %201 = arith.mulf %196, %200 : vector<2x32xf32>
    %202 = arith.maximumf %184, %201 : vector<2x32xf32>
    %203 = vector.extract_strided_slice %97 {offsets = [10, 0], sizes = [2, 128], strides = [1, 1]} : vector<16x128xf32> to vector<2x128xf32>
    %204 = arith.truncf %201 : vector<2x32xf32> to vector<2x32xbf16>
    %cst_81 = arith.constant dense<0.000000e+00> : vector<2x128xf32>
    %205 = tpu.matmul %204, %67, %cst_81 {dimension_numbers = #tpu.dot_dimension_numbers<[1], [0], [0], [1], [0, 0, 1, 1], [], []>} : vector<2x32xbf16>, vector<32x128xbf16>, vector<2x128xf32> -> vector<2x128xf32>
    %206 = arith.addf %203, %205 : vector<2x128xf32>
    %207 = arith.mulf %206, %106 : vector<2x128xf32>
    %208 = math.tanh %207 : vector<2x128xf32>
    %209 = arith.mulf %208, %106 : vector<2x128xf32>
    %210 = arith.addf %209, %109 : vector<2x128xf32>
    %211 = vector.extract_strided_slice %210 {offsets = [0, 0], sizes = [2, 32], strides = [1, 1]} : vector<2x128xf32> to vector<2x32xf32>
    %212 = vector.extract_strided_slice %210 {offsets = [0, 32], sizes = [2, 32], strides = [1, 1]} : vector<2x128xf32> to vector<2x32xf32>
    %213 = vector.extract_strided_slice %210 {offsets = [0, 64], sizes = [2, 32], strides = [1, 1]} : vector<2x128xf32> to vector<2x32xf32>
    %214 = vector.extract_strided_slice %210 {offsets = [0, 96], sizes = [2, 32], strides = [1, 1]} : vector<2x128xf32> to vector<2x32xf32>
    %215 = arith.mulf %212, %199 : vector<2x32xf32>
    %216 = arith.mulf %211, %213 : vector<2x32xf32>
    %217 = arith.addf %215, %216 : vector<2x32xf32>
    %218 = math.tanh %217 : vector<2x32xf32>
    %219 = arith.mulf %214, %218 : vector<2x32xf32>
    %220 = arith.maximumf %202, %219 : vector<2x32xf32>
    %221 = vector.extract_strided_slice %97 {offsets = [12, 0], sizes = [2, 128], strides = [1, 1]} : vector<16x128xf32> to vector<2x128xf32>
    %222 = arith.truncf %219 : vector<2x32xf32> to vector<2x32xbf16>
    %cst_82 = arith.constant dense<0.000000e+00> : vector<2x128xf32>
    %223 = tpu.matmul %222, %67, %cst_82 {dimension_numbers = #tpu.dot_dimension_numbers<[1], [0], [0], [1], [0, 0, 1, 1], [], []>} : vector<2x32xbf16>, vector<32x128xbf16>, vector<2x128xf32> -> vector<2x128xf32>
    %224 = arith.addf %221, %223 : vector<2x128xf32>
    %225 = arith.mulf %224, %106 : vector<2x128xf32>
    %226 = math.tanh %225 : vector<2x128xf32>
    %227 = arith.mulf %226, %106 : vector<2x128xf32>
    %228 = arith.addf %227, %109 : vector<2x128xf32>
    %229 = vector.extract_strided_slice %228 {offsets = [0, 0], sizes = [2, 32], strides = [1, 1]} : vector<2x128xf32> to vector<2x32xf32>
    %230 = vector.extract_strided_slice %228 {offsets = [0, 32], sizes = [2, 32], strides = [1, 1]} : vector<2x128xf32> to vector<2x32xf32>
    %231 = vector.extract_strided_slice %228 {offsets = [0, 64], sizes = [2, 32], strides = [1, 1]} : vector<2x128xf32> to vector<2x32xf32>
    %232 = vector.extract_strided_slice %228 {offsets = [0, 96], sizes = [2, 32], strides = [1, 1]} : vector<2x128xf32> to vector<2x32xf32>
    %233 = arith.mulf %230, %217 : vector<2x32xf32>
    %234 = arith.mulf %229, %231 : vector<2x32xf32>
    %235 = arith.addf %233, %234 : vector<2x32xf32>
    %236 = math.tanh %235 : vector<2x32xf32>
    %237 = arith.mulf %232, %236 : vector<2x32xf32>
    %238 = arith.maximumf %220, %237 : vector<2x32xf32>
    %239 = vector.extract_strided_slice %97 {offsets = [14, 0], sizes = [2, 128], strides = [1, 1]} : vector<16x128xf32> to vector<2x128xf32>
    %240 = arith.truncf %237 : vector<2x32xf32> to vector<2x32xbf16>
    %cst_83 = arith.constant dense<0.000000e+00> : vector<2x128xf32>
    %241 = tpu.matmul %240, %67, %cst_83 {dimension_numbers = #tpu.dot_dimension_numbers<[1], [0], [0], [1], [0, 0, 1, 1], [], []>} : vector<2x32xbf16>, vector<32x128xbf16>, vector<2x128xf32> -> vector<2x128xf32>
    %242 = arith.addf %239, %241 : vector<2x128xf32>
    %243 = arith.mulf %242, %106 : vector<2x128xf32>
    %244 = math.tanh %243 : vector<2x128xf32>
    %245 = arith.mulf %244, %106 : vector<2x128xf32>
    %246 = arith.addf %245, %109 : vector<2x128xf32>
    %247 = vector.extract_strided_slice %246 {offsets = [0, 0], sizes = [2, 32], strides = [1, 1]} : vector<2x128xf32> to vector<2x32xf32>
    %248 = vector.extract_strided_slice %246 {offsets = [0, 32], sizes = [2, 32], strides = [1, 1]} : vector<2x128xf32> to vector<2x32xf32>
    %249 = vector.extract_strided_slice %246 {offsets = [0, 64], sizes = [2, 32], strides = [1, 1]} : vector<2x128xf32> to vector<2x32xf32>
    %250 = vector.extract_strided_slice %246 {offsets = [0, 96], sizes = [2, 32], strides = [1, 1]} : vector<2x128xf32> to vector<2x32xf32>
    %251 = arith.mulf %248, %235 : vector<2x32xf32>
    %252 = arith.mulf %247, %249 : vector<2x32xf32>
    %253 = arith.addf %251, %252 : vector<2x32xf32>
    %254 = math.tanh %253 : vector<2x32xf32>
    %255 = arith.mulf %250, %254 : vector<2x32xf32>
    %256 = arith.maximumf %238, %255 : vector<2x32xf32>
    %257 = math.tanh %256 : vector<2x32xf32>
    %258 = math.tanh %257 : vector<2x32xf32>
    %259 = arith.truncf %258 : vector<2x32xf32> to vector<2x32xbf16>
    %cst_84 = arith.constant dense<0.000000e+00> : vector<2x4xf32>
    %260 = tpu.matmul %259, %68, %cst_84 {dimension_numbers = #tpu.dot_dimension_numbers<[1], [0], [0], [1], [0, 0, 1, 1], [], []>} : vector<2x32xbf16>, vector<32x4xbf16>, vector<2x4xf32> -> vector<2x4xf32>
    %261 = vector.broadcast %72 : vector<1x4xf32> to vector<2x4xf32>
    %262 = arith.addf %260, %261 : vector<2x4xf32>
    %cst_85 = arith.constant dense<0xFF800000> : vector<2xf32>
    %263 = vector.multi_reduction <maximumf>, %262, %cst_85 [1] : vector<2x4xf32> to vector<2xf32>
    %264 = vector.shape_cast %263 : vector<2xf32> to vector<2x1xf32>
    %265 = vector.broadcast %264 : vector<2x1xf32> to vector<2x4xf32>
    %266 = arith.subf %262, %265 : vector<2x4xf32>
    %267 = math.exp %266 : vector<2x4xf32>
    %cst_86 = arith.constant dense<0.000000e+00> : vector<2xf32>
    %268 = vector.multi_reduction <add>, %267, %cst_86 [1] : vector<2x4xf32> to vector<2xf32>
    %269 = vector.shape_cast %268 : vector<2xf32> to vector<2x1xf32>
    %270 = vector.broadcast %269 : vector<2x1xf32> to vector<2x4xf32>
    %271 = arith.divf %267, %270 : vector<2x4xf32>
    %c0_87 = arith.constant 0 : index
    %c0_88 = arith.constant 0 : index
    %272 = vector.load %arg5[%c0_87, %c0_88] : memref<2x4xf32, #tpu.memory_space<vmem>>, vector<2x4xf32>
    tpu.vector_store %arg5[%c0_87, %c0_88], %271 {strides = array<i32>} : memref<2x4xf32, #tpu.memory_space<vmem>>, vector<2x4xf32>,
    return
  }
  func.func @transform_0(%arg0: i32, %arg1: memref<16xi32, #tpu.memory_space<smem>>) -> (i32, i32) {
    %c0_i32 = arith.constant 0 : i32
    %c0_i32_0 = arith.constant 0 : i32
    %c0_i32_1 = arith.constant 0 : i32
    return %c0_i32, %c0_i32_0 : i32, i32
  }
  func.func @transform_1(%arg0: i32, %arg1: memref<16xi32, #tpu.memory_space<smem>>) -> (i32, i32) {
    %c0_i32 = arith.constant 0 : i32
    %c0_i32_0 = arith.constant 0 : i32
    %c0_i32_1 = arith.constant 0 : i32
    return %c0_i32, %c0_i32_0 : i32, i32
  }
  func.func @transform_2(%arg0: i32, %arg1: memref<16xi32, #tpu.memory_space<smem>>) -> (i32, i32) {
    %c0_i32 = arith.constant 0 : i32
    %c0_i32_0 = arith.constant 0 : i32
    %c0_i32_1 = arith.constant 0 : i32
    return %c0_i32, %c0_i32_0 : i32, i32
  }
  func.func @transform_3(%arg0: i32, %arg1: memref<16xi32, #tpu.memory_space<smem>>) -> (i32, i32) {
    %c0_i32 = arith.constant 0 : i32
    %c0_i32_0 = arith.constant 0 : i32
    %c0_i32_1 = arith.constant 0 : i32
    return %c0_i32, %c0_i32_0 : i32, i32
  }
}

</mosaic_0001>

<llo_original>
// kernel: tpu_custom_call.1
$region0: #{tpu_custom_call.1}
  #allocation0 [shape = 'u32[]', space=smem, size = 0x4, offset = 0x4, fixed_abs, tag = 'smem constant byte address 0x4 - core index']
  #allocation1 [shape = 'u32[144,128]{1,0:T(1,128)}', space=vmem, size = 0x12000, scoped, tag = 'internal scratch']
  #allocation2 [shape = 'f32[16,32]{1,0:T(8,128)}', space=vmem, size = 0x2000, scoped, tag = 'scratch operand']
  #allocation3 [shape = 's32[1]{0}', space=sflag, size = 0x4, scoped, tag = 'scoped memory for tpu_custom_call.1']
  #allocation4 [shape = 'u8[512]{0}', space=smem, size = 0x200, scoped, tag = 'prefetched SMEM operand 0']
  %s0 = inlined_call_operand.vmem [shape: s32[16], index: 0, kind: input, shape index: {}]
  %s1 = inlined_call_operand.vmem [shape: f32[100,32], index: 1, kind: input, shape index: {}]
  %s2 = inlined_call_operand.vmem [shape: bf16[32,512], index: 2, kind: input, shape index: {}]
  %s3 = inlined_call_operand.vmem [shape: f32[1,640], index: 3, kind: input, shape index: {}]
  %s4 = inlined_call_operand.hbm [shape: f32[2,4], index: 4, kind: output, shape index: {}]
  %s5 = sld [smem:[#allocation0]]
  $region22: #{tpu_custom_call.1} parent=0
    _
  %s7 = ssub.s32 1, %s5
  %s8 = scalar_select 0, %s7, %s5
  %s9 = sshll.u32 %s0, 4
  %s10 = int_to_ptr.vmem [resolvable:$true] %s9
  %12 = dma.vmem_to_smem %s10, 16, [#allocation4], [#allocation3]
  %13 = dma.done [#allocation3], 16
  %14 = sfence
  $region1: #{tpu_custom_call.1} parent=0
    #allocation5 [shape = 'u8[1024]{0}', space=vmem, size = 0x400, scoped, tag = 'output window, operand 0, single buffered']
    #allocation6 [shape = 's32[1]{0}', space=sflag, size = 0x4, scoped, tag = 'scoped memory for tpu_custom_call.1']
    %15 = vsyncpa [#allocation6], 0
    // Predicated region
    $region2: #{tpu_custom_call.1} parent=1 // pred_check
      _
    $region3: #{tpu_custom_call.1} parent=1 // pred_check_branch
      %17 = sbr.rel (0) target = $region5
    $region4: #{tpu_custom_call.1} parent=1 // pred_region
      _
    $region5: #{tpu_custom_call.1} parent=1 // pred_fallthru
      _
    // Predicated region
    $region6: #{tpu_custom_call.1} parent=1 // pred_check
      _
    $region7: #{tpu_custom_call.1} parent=1 // pred_check_branch
      %19 = sbr.rel (0) target = $region9
    $region8: #{tpu_custom_call.1} parent=1 // pred_region
      _
    $region9: #{tpu_custom_call.1} parent=1 // pred_fallthru
      _
    // Predicated region
    $region10: #{tpu_custom_call.1} parent=1 // pred_check
      _
    $region11: #{tpu_custom_call.1} parent=1 // pred_check_branch
      %21 = sbr.rel (0) target = $region13
    $region12: #{tpu_custom_call.1} parent=1 // pred_region
      _
    $region13: #{tpu_custom_call.1} parent=1 // pred_fallthru
      _
    %s23 = sld [smem:[#allocation4]]
    %s24 = scalar_lea.vmem %s1, %s23
    %v25 = vld [vmem:[%s24] sm:$0x1]
    %vm26 = vcmask 253952
    %27 = vst.msk [vmem:[#allocation2] sm:$0x1] %vm26, %v25
    %s28 = sld [smem:[#allocation4 + $0x1]]
    %s29 = scalar_lea.vmem %s1, %s28
    %v30 = vld [vmem:[%s29] sm:$0x1]
    %31 = vst.msk [vmem:[#allocation2 + $0x1] sm:$0x1] %vm26, %v30
    %s32 = sld [smem:[#allocation4 + $0x2]]
    %s33 = scalar_lea.vmem %s1, %s32
    %v34 = vld [vmem:[%s33] sm:$0x1]
    %35 = vst.msk [vmem:[#allocation2 + $0x2] sm:$0x1] %vm26, %v34
    %s36 = sld [smem:[#allocation4 + $0x3]]
    %s37 = scalar_lea.vmem %s1, %s36
    %v38 = vld [vmem:[%s37] sm:$0x1]
    %39 = vst.msk [vmem:[#allocation2 + $0x3] sm:$0x1] %vm26, %v38
    %s40 = sld [smem:[#allocation4 + $0x4]]
    %s41 = scalar_lea.vmem %s1, %s40
    %v42 = vld [vmem:[%s41] sm:$0x1]
    %43 = vst.msk [vmem:[#allocation2 + $0x4] sm:$0x1] %vm26, %v42
    %s44 = sld [smem:[#allocation4 + $0x5]]
    %s45 = scalar_lea.vmem %s1, %s44
    %v46 = vld [vmem:[%s45] sm:$0x1]
    %47 = vst.msk [vmem:[#allocation2 + $0x5] sm:$0x1] %vm26, %v46
    %s48 = sld [smem:[#allocation4 + $0x6]]
    %s49 = scalar_lea.vmem %s1, %s48
    %v50 = vld [vmem:[%s49] sm:$0x1]
    %51 = vst.msk [vmem:[#allocation2 + $0x6] sm:$0x1] %vm26, %v50
    %s52 = sld [smem:[#allocation4 + $0x7]]
    %s53 = scalar_lea.vmem %s1, %s52
    %v54 = vld [vmem:[%s53] sm:$0x1]
    %55 = vst.msk [vmem:[#allocation2 + $0x7] sm:$0x1] %vm26, %v54
    %s56 = sld [smem:[#allocation4 + $0x8]]
    %s57 = scalar_lea.vmem %s1, %s56
    %v58 = vld [vmem:[%s57] sm:$0x1]
    %59 = vst.msk [vmem:[#allocation2 + $0x8] sm:$0x1] %vm26, %v58
    %s60 = sld [smem:[#allocation4 + $0x9]]
    %s61 = scalar_lea.vmem %s1, %s60
    %v62 = vld [vmem:[%s61] sm:$0x1]
    %63 = vst.msk [vmem:[#allocation2 + $0x9] sm:$0x1] %vm26, %v62
    %s64 = sld [smem:[#allocation4 + $0xa]]
    %s65 = scalar_lea.vmem %s1, %s64
    %v66 = vld [vmem:[%s65] sm:$0x1]
    %67 = vst.msk [vmem:[#allocation2 + $0xa] sm:$0x1] %vm26, %v66
    %s68 = sld [smem:[#allocation4 + $0xb]]
    %s69 = scalar_lea.vmem %s1, %s68
    %v70 = vld [vmem:[%s69] sm:$0x1]
    %71 = vst.msk [vmem:[#allocation2 + $0xb] sm:$0x1] %vm26, %v70
    %s72 = sld [smem:[#allocation4 + $0xc]]
    %s73 = scalar_lea.vmem %s1, %s72
    %v74 = vld [vmem:[%s73] sm:$0x1]
    %75 = vst.msk [vmem:[#allocation2 + $0xc] sm:$0x1] %vm26, %v74
    %s76 = sld [smem:[#allocation4 + $0xd]]
    %s77 = scalar_lea.vmem %s1, %s76
    %v78 = vld [vmem:[%s77] sm:$0x1]
    %79 = vst.msk [vmem:[#allocation2 + $0xd] sm:$0x1] %vm26, %v78
    %s80 = sld [smem:[#allocation4 + $0xe]]
    %s81 = scalar_lea.vmem %s1, %s80
    %v82 = vld [vmem:[%s81] sm:$0x1]
    %83 = vst.msk [vmem:[#allocation2 + $0xe] sm:$0x1] %vm26, %v82
    %s84 = sld [smem:[#allocation4 + $0xf]]
    %s85 = scalar_lea.vmem %s1, %s84
    %v86 = vld [vmem:[%s85] sm:$0x1]
    %87 = vst.msk [vmem:[#allocation2 + $0xf] sm:$0x1] %vm26, %v86
    %v88 = vld [vmem:[#allocation2] sm:$0xff]
    %v89 = vld [vmem:[#allocation2 + $0x8] sm:$0xff]
    %v90 = vld [vmem:[%s2] sm:$0xf]
    %v91 = vld [vmem:[%s2 + $0x10] sm:$0xf]
    %v92 = vld [vmem:[%s2 + $0x20] sm:$0xf]
    %v93 = vld [vmem:[%s2 + $0x30] sm:$0xf]
    %v94 = vld [vmem:[%s2 + $0x4] sm:$0xf]
    %v95 = vld [vmem:[%s2 + $0x14] sm:$0xf]
    %v96 = vld [vmem:[%s2 + $0x24] sm:$0xf]
    %v97 = vld [vmem:[%s2 + $0x34] sm:$0xf]
    %v98 = vld [vmem:[%s2 + $0x8] sm:$0xf]
    %v99 = vld [vmem:[%s2 + $0x18] sm:$0xf]
    %v100 = vld [vmem:[%s2 + $0x28] sm:$0xf]
    %v101 = vld [vmem:[%s2 + $0x38] sm:$0xf]
    %v102 = vld [vmem:[%s2 + $0xc] sm:$0xf]
    %v103 = vld [vmem:[%s2 + $0x1c] sm:$0xf]
    %v104 = vld [vmem:[%s2 + $0x2c] sm:$0xf]
    %v105 = vld [vmem:[%s2 + $0x3c] sm:$0xf]
    %v106 = vld [vmem:[%s3] sm:$0x1]
    %v107 = vld [vmem:[%s3 + $0x1] sm:$0x1]
    %v108 = vld [vmem:[%s3 + $0x2] sm:$0x1]
    %v109 = vld [vmem:[%s3 + $0x3] sm:$0x1]
    %v110 = vld [vmem:[%s3 + $0x4] sm:$0x1]
    %v111 = vpack.c.bf16 %v89, %v88
    %v113 = vlaneseq
    %v114 = vshrl.u32 %v113, 7
    %v115 = vsub.s32 0, %v114
    %v116 = vrot.slane %v106, %v115
    %v122 = vunpack.c.l.b16 %v90
    %v123 = vunpack.c.l.b16 %v91
    %v124 = vunpack.c.l.b16 %v92
    %v125 = vunpack.c.l.b16 %v93
    %v126 = vpack.c.b16 %v123, %v122
    %v127 = vpack.c.b16 %v125, %v124
    %vm130 = vcmask 261120
    %v132 = vsel %vm130, %v111, 0
    %134 = vmatprep.subr.bf16.mxu0 0
    %135 = vmatpush1.bf16.msra.mxu0 0
    %136 = vmatprep.subr.bf16.mxu0 0
    %137 = vmatpush1.bf16.msra.mxu0 0
    %138 = vmatprep.subr.bf16.mxu0 0
    %139 = vmatpush1.bf16.msra.mxu0 0
    %140 = vmatprep.subr.bf16.mxu0 0
    %141 = vmatpush1.bf16.msra.mxu0 0
    %142 = vmatprep.subr.bf16.mxu0 0
    %143 = vmatpush1.bf16.msra.mxu0 0
    %144 = vmatprep.subr.bf16.mxu0 0
    %145 = vmatpush1.bf16.msra.mxu0 0
    %146 = vmatprep.subr.bf16.mxu0 0
    %147 = vmatpush1.bf16.msra.mxu0 %v127
    %148 = vmatprep.subr.bf16.mxu0 0
    %149 = vmatpush1.bf16.msra.mxu0 %v126
    %150 = vmatprep.subr.bf16.mxu0 0
    %151 = vmatpush2.bf16.msra.mxu0 0
    %152 = vmatprep.subr.bf16.mxu0 0
    %153 = vmatpush2.bf16.msra.mxu0 0
    %154 = vmatprep.subr.bf16.mxu0 0
    %155 = vmatpush2.bf16.msra.mxu0 0
    %156 = vmatprep.subr.bf16.mxu0 0
    %157 = vmatpush2.bf16.msra.mxu0 0
    %158 = vmatprep.subr.bf16.mxu0 0
    %159 = vmatpush2.bf16.msra.mxu0 0
    %160 = vmatprep.subr.bf16.mxu0 0
    %161 = vmatpush2.bf16.msra.mxu0 0
    %162 = vmatprep.subr.bf16.mxu0 0
    %163 = vmatpush2.bf16.msra.mxu0 0
    %164 = vmatprep.subr.bf16.mxu0 0
    %165 = vmatpush2.bf16.msra.mxu0 0
    %166 = vmatprep.mubr.bf16.mxu0 0
    %167 = vmatmul.mubr.bf16.gmra.mxu0 %v132
    %v168 = vpop.f32.mrf.mxu0
    %v169 = vadd.f32 %v116, %v168
    %v170 = vpop.f32.mrf.mxu0
    %v171 = vpop.f32.mrf.mxu0
    %v172 = vadd.f32 %v116, %v171
    %v173 = vpop.f32.mrf.mxu0
    %174 = vdwg.mxu0
    %v175 = vtanh.pop %v169
    %v176 = vtanh.pop %v172
    %v178 = vlaneseq
    %v179 = vshrl.u32 %v178, 7
    %v180 = vsub.s32 0, %v179
    %v181 = vrot.slane %v107, %v180
    %v183 = vmul.f32 %v175, %v181
    %v184 = vmul.f32 %v176, %v181
    %v185 = vsel %vm130, %v183, 0.0
    %186 = vadd.xlane.f32.xlu0 %v185
    %v187 = vpop.xlane.xlu0 %186
    %v188 = vsel %vm130, %v184, 0.0
    %189 = vadd.xlane.f32.xlu0 %v188
    %v190 = vpop.xlane.xlu0 %189
    %v192 = vlaneseq
    %v193 = vshrl.u32 %v192, 7
    %v194 = vsub.s32 0, %v193
    %v195 = vrot.slane %v110, %v194
    %v197 = vadd.f32 %v187, %v195
    %v198 = vadd.f32 %v190, %v195
    %v199 = vmul.f32 %v197, 0.5
    %v200 = vmul.f32 %v198, 0.5
    %v201 = vtanh.pop %v199
    %v202 = vtanh.pop %v200
    %v203 = vadd.f32 %v201, 1.0
    %v204 = vadd.f32 %v202, 1.0
    %v205 = vmul.f32 %v203, 0.5
    %v206 = vmul.f32 %v204, 0.5
    %208 = vset.pattern.permute.xlu0 0
    %209 = vperm.xlu0 %208, %v205
    %v210 = vpop.permute.xlu0 %209
    %213 = vset.pattern.permute.xlu0 0
    %214 = vperm.xlu0 %213, %v206
    %v215 = vpop.permute.xlu0 %214
    %v217 = vmul.f32 %v210, %v88
    %v218 = vmul.f32 %v215, %v89
    %v219 = vpack.c.bf16 %v218, %v217
    %v221 = vlaneseq
    %v222 = vshrl.u32 %v221, 7
    %v223 = vsub.s32 0, %v222
    %v224 = vrot.slane %v108, %v223
    %v230 = vunpack.c.l.b16 %v94
    %v231 = vunpack.c.l.b16 %v95
    %v232 = vunpack.c.l.b16 %v96
    %v233 = vunpack.c.l.b16 %v97
    %v234 = vpack.c.b16 %v231, %v230
    %v235 = vpack.c.b16 %v233, %v232
    %v239 = vsel %vm130, %v219, 0
    %241 = vmatprep.subr.bf16.mxu0 0
    %242 = vmatpush1.bf16.msra.mxu0 0
    %243 = vmatprep.subr.bf16.mxu0 0
    %244 = vmatpush1.bf16.msra.mxu0 0
    %245 = vmatprep.subr.bf16.mxu0 0
    %246 = vmatpush1.bf16.msra.mxu0 0
    %247 = vmatprep.subr.bf16.mxu0 0
    %248 = vmatpush1.bf16.msra.mxu0 0
    %249 = vmatprep.subr.bf16.mxu0 0
    %250 = vmatpush1.bf16.msra.mxu0 0
    %251 = vmatprep.subr.bf16.mxu0 0
    %252 = vmatpush1.bf16.msra.mxu0 0
    %253 = vmatprep.subr.bf16.mxu0 0
    %254 = vmatpush1.bf16.msra.mxu0 %v235
    %255 = vmatprep.subr.bf16.mxu0 0
    %256 = vmatpush1.bf16.msra.mxu0 %v234
    %257 = vmatprep.subr.bf16.mxu0 0
    %258 = vmatpush2.bf16.msra.mxu0 0
    %259 = vmatprep.subr.bf16.mxu0 0
    %260 = vmatpush2.bf16.msra.mxu0 0
    %261 = vmatprep.subr.bf16.mxu0 0
    %262 = vmatpush2.bf16.msra.mxu0 0
    %263 = vmatprep.subr.bf16.mxu0 0
    %264 = vmatpush2.bf16.msra.mxu0 0
    %265 = vmatprep.subr.bf16.mxu0 0
    %266 = vmatpush2.bf16.msra.mxu0 0
    %267 = vmatprep.subr.bf16.mxu0 0
    %268 = vmatpush2.bf16.msra.mxu0 0
    %269 = vmatprep.subr.bf16.mxu0 0
    %270 = vmatpush2.bf16.msra.mxu0 0
    %271 = vmatprep.subr.bf16.mxu0 0
    %272 = vmatpush2.bf16.msra.mxu0 0
    %273 = vmatprep.mubr.bf16.mxu0 0
    %274 = vmatmul.mubr.bf16.gmra.mxu0 %v239
    %v275 = vpop.f32.mrf.mxu0
    %v276 = vadd.f32 %v224, %v275
    %v277 = vpop.f32.mrf.mxu0
    %v278 = vpop.f32.mrf.mxu0
    %v279 = vadd.f32 %v224, %v278
    %v280 = vpop.f32.mrf.mxu0
    %281 = vdwg.mxu0
    %v282 = vlaneseq
    %v283 = vand.u32 %v282, 127
    %vm284 = vcmp.ge.s32.totalorder %v283, 64
    %vm285 = vcmp.lt.s32.totalorder %v283, 96
    %vm286 = vmand %vm284, %vm285
    %v287 = vsel %vm286, 1.0, 0.5
    %v288 = vsel %vm286, 0.0, 0.5
    %v293 = vunpack.c.l.b16 %v98
    %v294 = vunpack.c.l.b16 %v99
    %v295 = vunpack.c.l.b16 %v100
    %v296 = vunpack.c.l.b16 %v101
    %v297 = vpack.c.b16 %v294, %v293
    %v298 = vpack.c.b16 %v296, %v295
    %v302 = vsel %vm130, 0, 0
    %304 = vmatprep.subr.bf16.mxu0 0
    %305 = vmatpush1.bf16.msra.mxu0 0
    %306 = vmatprep.subr.bf16.mxu0 0
    %307 = vmatpush1.bf16.msra.mxu0 0
    %308 = vmatprep.subr.bf16.mxu0 0
    %309 = vmatpush1.bf16.msra.mxu0 0
    %310 = vmatprep.subr.bf16.mxu0 0
    %311 = vmatpush1.bf16.msra.mxu0 0
    %312 = vmatprep.subr.bf16.mxu0 0
    %313 = vmatpush1.bf16.msra.mxu0 0
    %314 = vmatprep.subr.bf16.mxu0 0
    %315 = vmatpush1.bf16.msra.mxu0 0
    %316 = vmatprep.subr.bf16.mxu0 0
    %317 = vmatpush1.bf16.msra.mxu0 %v298
    %318 = vmatprep.subr.bf16.mxu0 0
    %319 = vmatpush1.bf16.msra.mxu0 %v297
    %320 = vmatprep.subr.bf16.mxu0 0
    %321 = vmatpush2.bf16.msra.mxu0 0
    %322 = vmatprep.subr.bf16.mxu0 0
    %323 = vmatpush2.bf16.msra.mxu0 0
    %324 = vmatprep.subr.bf16.mxu0 0
    %325 = vmatpush2.bf16.msra.mxu0 0
    %326 = vmatprep.subr.bf16.mxu0 0
    %327 = vmatpush2.bf16.msra.mxu0 0
    %328 = vmatprep.subr.bf16.mxu0 0
    %329 = vmatpush2.bf16.msra.mxu0 0
    %330 = vmatprep.subr.bf16.mxu0 0
    %331 = vmatpush2.bf16.msra.mxu0 0
    %332 = vmatprep.subr.bf16.mxu0 0
    %333 = vmatpush2.bf16.msra.mxu0 0
    %334 = vmatprep.subr.bf16.mxu0 0
    %335 = vmatpush2.bf16.msra.mxu0 0
    %336 = vmatprep.mubr.bf16.mxu0 0
    %337 = vmatmul.mubr.bf16.gmra.mxu0 %v302
    %v338 = vpop.f32.mrf.mxu0
    %v339 = vadd.f32 0.0, %v338
    %v340 = vpop.f32.mrf.mxu0
    %v341 = vpop.f32.mrf.mxu0
    %v342 = vpop.f32.mrf.mxu0
    %343 = vdwg.mxu0
    %v344 = vadd.f32 %v276, %v339
    %v345 = vmul.f32 %v344, %v287
    %v346 = vtanh.pop %v345
    %v347 = vmul.f32 %v346, %v287
    %v348 = vadd.f32 %v347, %v288
    %v349 = vmul.f32 %v348, 0.0
    %351 = vrot.lane.b32.xlu0 %v348, 64
    %v352 = vpop.permute.xlu0 %351
    %v354 = vmul.f32 %v348, %v352
    %356 = vrot.lane.b32.xlu0 %v354, 32
    %v357 = vpop.permute.xlu0 %356
    %v359 = vadd.f32 %v349, %v357
    %v360 = vtanh.pop %v359
    %362 = vrot.lane.b32.xlu0 %v360, 64
    %v363 = vpop.permute.xlu0 %362
    %v365 = vmul.f32 %v348, %v363
    %v366 = vpack.c.bf16 %v365, %v365
    %368 = vrot.lane.b32.xlu0 %v366, 32
    %v369 = vpop.permute.xlu0 %368
    %v371 = vsel %vm130, %v369, 0
    %373 = vmatprep.subr.bf16.mxu0 0
    %374 = vmatpush1.bf16.msra.mxu0 0
    %375 = vmatprep.subr.bf16.mxu0 0
    %376 = vmatpush1.bf16.msra.mxu0 0
    %377 = vmatprep.subr.bf16.mxu0 0
    %378 = vmatpush1.bf16.msra.mxu0 0
    %379 = vmatprep.subr.bf16.mxu0 0
    %380 = vmatpush1.bf16.msra.mxu0 0
    %381 = vmatprep.subr.bf16.mxu0 0
    %382 = vmatpush1.bf16.msra.mxu0 0
    %383 = vmatprep.subr.bf16.mxu0 0
    %384 = vmatpush1.bf16.msra.mxu0 0
    %385 = vmatprep.subr.bf16.mxu0 0
    %386 = vmatpush1.bf16.msra.mxu0 %v298
    %387 = vmatprep.subr.bf16.mxu0 0
    %388 = vmatpush1.bf16.msra.mxu0 %v297
    %389 = vmatprep.subr.bf16.mxu0 0
    %390 = vmatpush2.bf16.msra.mxu0 0
    %391 = vmatprep.subr.bf16.mxu0 0
    %392 = vmatpush2.bf16.msra.mxu0 0
    %393 = vmatprep.subr.bf16.mxu0 0
    %394 = vmatpush2.bf16.msra.mxu0 0
    %395 = vmatprep.subr.bf16.mxu0 0
    %396 = vmatpush2.bf16.msra.mxu0 0
    %397 = vmatprep.subr.bf16.mxu0 0
    %398 = vmatpush2.bf16.msra.mxu0 0
    %399 = vmatprep.subr.bf16.mxu0 0
    %400 = vmatpush2.bf16.msra.mxu0 0
    %401 = vmatprep.subr.bf16.mxu0 0
    %402 = vmatpush2.bf16.msra.mxu0 0
    %403 = vmatprep.subr.bf16.mxu0 0
    %404 = vmatpush2.bf16.msra.mxu0 0
    %405 = vmatprep.mubr.bf16.mxu0 0
    %406 = vmatmul.mubr.bf16.gmra.mxu0 %v371
    %v407 = vpop.f32.mrf.mxu0
    %v408 = vadd.f32 0.0, %v407
    %v409 = vpop.f32.mrf.mxu0
    %v410 = vpop.f32.mrf.mxu0
    %v411 = vpop.f32.mrf.mxu0
    %412 = vdwg.mxu0
    %v414 = vrot.slane %v408, 6
    %v416 = vadd.f32 %v276, %v414
    %v417 = vmul.f32 %v416, %v287
    %v418 = vtanh.pop %v417
    %v419 = vmul.f32 %v418, %v287
    %v420 = vadd.f32 %v419, %v288
    %v422 = vrot.slane %v359, 6
    %v424 = vmul.f32 %v420, %v422
    %426 = vrot.lane.b32.xlu0 %v420, 64
    %v427 = vpop.permute.xlu0 %426
    %v429 = vmul.f32 %v420, %v427
    %431 = vrot.lane.b32.xlu0 %v429, 32
    %v432 = vpop.permute.xlu0 %431
    %v434 = vadd.f32 %v424, %v432
    %v435 = vtanh.pop %v434
    %437 = vrot.lane.b32.xlu0 %v435, 64
    %v438 = vpop.permute.xlu0 %437
    %v440 = vmul.f32 %v420, %v438
    %v442 = vrot.slane %v440, 2
    %v444 = vmax.f32 %v365, %v442
    %v445 = vpack.c.bf16 %v440, %v440
    %v447 = vrot.slane %v445, 1
    %448 = vrot.lane.b32.xlu0 %v447, 32
    %v449 = vpop.permute.xlu0 %448
    %v451 = vsel %vm130, %v449, 0
    %453 = vmatprep.subr.bf16.mxu0 0
    %454 = vmatpush1.bf16.msra.mxu0 0
    %455 = vmatprep.subr.bf16.mxu0 0
    %456 = vmatpush1.bf16.msra.mxu0 0
    %457 = vmatprep.subr.bf16.mxu0 0
    %458 = vmatpush1.bf16.msra.mxu0 0
    %459 = vmatprep.subr.bf16.mxu0 0
    %460 = vmatpush1.bf16.msra.mxu0 0
    %461 = vmatprep.subr.bf16.mxu0 0
    %462 = vmatpush1.bf16.msra.mxu0 0
    %463 = vmatprep.subr.bf16.mxu0 0
    %464 = vmatpush1.bf16.msra.mxu0 0
    %465 = vmatprep.subr.bf16.mxu0 0
    %466 = vmatpush1.bf16.msra.mxu0 %v298
    %467 = vmatprep.subr.bf16.mxu0 0
    %468 = vmatpush1.bf16.msra.mxu0 %v297
    %469 = vmatprep.subr.bf16.mxu0 0
    %470 = vmatpush2.bf16.msra.mxu0 0
    %471 = vmatprep.subr.bf16.mxu0 0
    %472 = vmatpush2.bf16.msra.mxu0 0
    %473 = vmatprep.subr.bf16.mxu0 0
    %474 = vmatpush2.bf16.msra.mxu0 0
    %475 = vmatprep.subr.bf16.mxu0 0
    %476 = vmatpush2.bf16.msra.mxu0 0
    %477 = vmatprep.subr.bf16.mxu0 0
    %478 = vmatpush2.bf16.msra.mxu0 0
    %479 = vmatprep.subr.bf16.mxu0 0
    %480 = vmatpush2.bf16.msra.mxu0 0
    %481 = vmatprep.subr.bf16.mxu0 0
    %482 = vmatpush2.bf16.msra.mxu0 0
    %483 = vmatprep.subr.bf16.mxu0 0
    %484 = vmatpush2.bf16.msra.mxu0 0
    %485 = vmatprep.mubr.bf16.mxu0 0
    %486 = vmatmul.mubr.bf16.gmra.mxu0 %v451
    %v487 = vpop.f32.mrf.mxu0
    %v488 = vadd.f32 0.0, %v487
    %v489 = vpop.f32.mrf.mxu0
    %v490 = vpop.f32.mrf.mxu0
    %v491 = vpop.f32.mrf.mxu0
    %492 = vdwg.mxu0
    %v494 = vrot.slane %v488, 4
    %v496 = vadd.f32 %v276, %v494
    %v497 = vmul.f32 %v496, %v287
    %v498 = vtanh.pop %v497
    %v499 = vmul.f32 %v498, %v287
    %v500 = vadd.f32 %v499, %v288
    %v502 = vrot.slane %v434, 6
    %v504 = vmul.f32 %v500, %v502
    %506 = vrot.lane.b32.xlu0 %v500, 64
    %v507 = vpop.permute.xlu0 %506
    %v509 = vmul.f32 %v500, %v507
    %511 = vrot.lane.b32.xlu0 %v509, 32
    %v512 = vpop.permute.xlu0 %511
    %v514 = vadd.f32 %v504, %v512
    %v515 = vtanh.pop %v514
    %517 = vrot.lane.b32.xlu0 %v515, 64
    %v518 = vpop.permute.xlu0 %517
    %v520 = vmul.f32 %v500, %v518
    %v522 = vrot.slane %v520, 4
    %v524 = vmax.f32 %v444, %v522
    %v525 = vpack.c.bf16 %v520, %v520
    %v527 = vrot.slane %v525, 2
    %528 = vrot.lane.b32.xlu0 %v527, 32
    %v529 = vpop.permute.xlu0 %528
    %v531 = vsel %vm130, %v529, 0
    %533 = vmatprep.subr.bf16.mxu0 0
    %534 = vmatpush1.bf16.msra.mxu0 0
    %535 = vmatprep.subr.bf16.mxu0 0
    %536 = vmatpush1.bf16.msra.mxu0 0
    %537 = vmatprep.subr.bf16.mxu0 0
    %538 = vmatpush1.bf16.msra.mxu0 0
    %539 = vmatprep.subr.bf16.mxu0 0
    %540 = vmatpush1.bf16.msra.mxu0 0
    %541 = vmatprep.subr.bf16.mxu0 0
    %542 = vmatpush1.bf16.msra.mxu0 0
    %543 = vmatprep.subr.bf16.mxu0 0
    %544 = vmatpush1.bf16.msra.mxu0 0
    %545 = vmatprep.subr.bf16.mxu0 0
    %546 = vmatpush1.bf16.msra.mxu0 %v298
    %547 = vmatprep.subr.bf16.mxu0 0
    %548 = vmatpush1.bf16.msra.mxu0 %v297
    %549 = vmatprep.subr.bf16.mxu0 0
    %550 = vmatpush2.bf16.msra.mxu0 0
    %551 = vmatprep.subr.bf16.mxu0 0
    %552 = vmatpush2.bf16.msra.mxu0 0
    %553 = vmatprep.subr.bf16.mxu0 0
    %554 = vmatpush2.bf16.msra.mxu0 0
    %555 = vmatprep.subr.bf16.mxu0 0
    %556 = vmatpush2.bf16.msra.mxu0 0
    %557 = vmatprep.subr.bf16.mxu0 0
    %558 = vmatpush2.bf16.msra.mxu0 0
    %559 = vmatprep.subr.bf16.mxu0 0
    %560 = vmatpush2.bf16.msra.mxu0 0
    %561 = vmatprep.subr.bf16.mxu0 0
    %562 = vmatpush2.bf16.msra.mxu0 0
    %563 = vmatprep.subr.bf16.mxu0 0
    %564 = vmatpush2.bf16.msra.mxu0 0
    %565 = vmatprep.mubr.bf16.mxu0 0
    %566 = vmatmul.mubr.bf16.gmra.mxu0 %v531
    %v567 = vpop.f32.mrf.mxu0
    %v568 = vadd.f32 0.0, %v567
    %v569 = vpop.f32.mrf.mxu0
    %v570 = vpop.f32.mrf.mxu0
    %v571 = vpop.f32.mrf.mxu0
    %572 = vdwg.mxu0
    %v574 = vrot.slane %v568, 2
    %v576 = vadd.f32 %v276, %v574
    %v577 = vmul.f32 %v576, %v287
    %v578 = vtanh.pop %v577
    %v579 = vmul.f32 %v578, %v287
    %v580 = vadd.f32 %v579, %v288
    %v582 = vrot.slane %v514, 6
    %v584 = vmul.f32 %v580, %v582
    %586 = vrot.lane.b32.xlu0 %v580, 64
    %v587 = vpop.permute.xlu0 %586
    %v589 = vmul.f32 %v580, %v587
    %591 = vrot.lane.b32.xlu0 %v589, 32
    %v592 = vpop.permute.xlu0 %591
    %v594 = vadd.f32 %v584, %v592
    %v595 = vtanh.pop %v594
    %597 = vrot.lane.b32.xlu0 %v595, 64
    %v598 = vpop.permute.xlu0 %597
    %v600 = vmul.f32 %v580, %v598
    %v602 = vrot.slane %v600, 6
    %v604 = vmax.f32 %v524, %v602
    %v605 = vpack.c.bf16 %v600, %v600
    %v607 = vrot.slane %v605, 3
    %608 = vrot.lane.b32.xlu0 %v607, 32
    %v609 = vpop.permute.xlu0 %608
    %v611 = vsel %vm130, %v609, 0
    %613 = vmatprep.subr.bf16.mxu0 0
    %614 = vmatpush1.bf16.msra.mxu0 0
    %615 = vmatprep.subr.bf16.mxu0 0
    %616 = vmatpush1.bf16.msra.mxu0 0
    %617 = vmatprep.subr.bf16.mxu0 0
    %618 = vmatpush1.bf16.msra.mxu0 0
    %619 = vmatprep.subr.bf16.mxu0 0
    %620 = vmatpush1.bf16.msra.mxu0 0
    %621 = vmatprep.subr.bf16.mxu0 0
    %622 = vmatpush1.bf16.msra.mxu0 0
    %623 = vmatprep.subr.bf16.mxu0 0
    %624 = vmatpush1.bf16.msra.mxu0 0
    %625 = vmatprep.subr.bf16.mxu0 0
    %626 = vmatpush1.bf16.msra.mxu0 %v298
    %627 = vmatprep.subr.bf16.mxu0 0
    %628 = vmatpush1.bf16.msra.mxu0 %v297
    %629 = vmatprep.subr.bf16.mxu0 0
    %630 = vmatpush2.bf16.msra.mxu0 0
    %631 = vmatprep.subr.bf16.mxu0 0
    %632 = vmatpush2.bf16.msra.mxu0 0
    %633 = vmatprep.subr.bf16.mxu0 0
    %634 = vmatpush2.bf16.msra.mxu0 0
    %635 = vmatprep.subr.bf16.mxu0 0
    %636 = vmatpush2.bf16.msra.mxu0 0
    %637 = vmatprep.subr.bf16.mxu0 0
    %638 = vmatpush2.bf16.msra.mxu0 0
    %639 = vmatprep.subr.bf16.mxu0 0
    %640 = vmatpush2.bf16.msra.mxu0 0
    %641 = vmatprep.subr.bf16.mxu0 0
    %642 = vmatpush2.bf16.msra.mxu0 0
    %643 = vmatprep.subr.bf16.mxu0 0
    %644 = vmatpush2.bf16.msra.mxu0 0
    %645 = vmatprep.mubr.bf16.mxu0 0
    %646 = vmatmul.mubr.bf16.gmra.mxu0 %v611
    %v647 = vpop.f32.mrf.mxu0
    %v648 = vadd.f32 0.0, %v647
    %v649 = vpop.f32.mrf.mxu0
    %v650 = vpop.f32.mrf.mxu0
    %v651 = vpop.f32.mrf.mxu0
    %652 = vdwg.mxu0
    %v653 = vadd.f32 %v279, %v648
    %v654 = vmul.f32 %v653, %v287
    %v655 = vtanh.pop %v654
    %v656 = vmul.f32 %v655, %v287
    %v657 = vadd.f32 %v656, %v288
    %v659 = vrot.slane %v594, 6
    %v661 = vmul.f32 %v657, %v659
    %663 = vrot.lane.b32.xlu0 %v657, 64
    %v664 = vpop.permute.xlu0 %663
    %v666 = vmul.f32 %v657, %v664
    %668 = vrot.lane.b32.xlu0 %v666, 32
    %v669 = vpop.permute.xlu0 %668
    %v671 = vadd.f32 %v661, %v669
    %v672 = vtanh.pop %v671
    %674 = vrot.lane.b32.xlu0 %v672, 64
    %v675 = vpop.permute.xlu0 %674
    %v677 = vmul.f32 %v657, %v675
    %v678 = vmax.f32 %v604, %v677
    %v679 = vpack.c.bf16 %v677, %v677
    %681 = vrot.lane.b32.xlu0 %v679, 32
    %v682 = vpop.permute.xlu0 %681
    %v684 = vsel %vm130, %v682, 0
    %686 = vmatprep.subr.bf16.mxu0 0
    %687 = vmatpush1.bf16.msra.mxu0 0
    %688 = vmatprep.subr.bf16.mxu0 0
    %689 = vmatpush1.bf16.msra.mxu0 0
    %690 = vmatprep.subr.bf16.mxu0 0
    %691 = vmatpush1.bf16.msra.mxu0 0
    %692 = vmatprep.subr.bf16.mxu0 0
    %693 = vmatpush1.bf16.msra.mxu0 0
    %694 = vmatprep.subr.bf16.mxu0 0
    %695 = vmatpush1.bf16.msra.mxu0 0
    %696 = vmatprep.subr.bf16.mxu0 0
    %697 = vmatpush1.bf16.msra.mxu0 0
    %698 = vmatprep.subr.bf16.mxu0 0
    %699 = vmatpush1.bf16.msra.mxu0 %v298
    %700 = vmatprep.subr.bf16.mxu0 0
    %701 = vmatpush1.bf16.msra.mxu0 %v297
    %702 = vmatprep.subr.bf16.mxu0 0
    %703 = vmatpush2.bf16.msra.mxu0 0
    %704 = vmatprep.subr.bf16.mxu0 0
    %705 = vmatpush2.bf16.msra.mxu0 0
    %706 = vmatprep.subr.bf16.mxu0 0
    %707 = vmatpush2.bf16.msra.mxu0 0
    %708 = vmatprep.subr.bf16.mxu0 0
    %709 = vmatpush2.bf16.msra.mxu0 0
    %710 = vmatprep.subr.bf16.mxu0 0
    %711 = vmatpush2.bf16.msra.mxu0 0
    %712 = vmatprep.subr.bf16.mxu0 0
    %713 = vmatpush2.bf16.msra.mxu0 0
    %714 = vmatprep.subr.bf16.mxu0 0
    %715 = vmatpush2.bf16.msra.mxu0 0
    %716 = vmatprep.subr.bf16.mxu0 0
    %717 = vmatpush2.bf16.msra.mxu0 0
    %718 = vmatprep.mubr.bf16.mxu0 0
    %719 = vmatmul.mubr.bf16.gmra.mxu0 %v684
    %v720 = vpop.f32.mrf.mxu0
    %v721 = vadd.f32 0.0, %v720
    %v722 = vpop.f32.mrf.mxu0
    %v723 = vpop.f32.mrf.mxu0
    %v724 = vpop.f32.mrf.mxu0
    %725 = vdwg.mxu0
    %v727 = vrot.slane %v721, 6
    %v729 = vadd.f32 %v279, %v727
    %v730 = vmul.f32 %v729, %v287
    %v731 = vtanh.pop %v730
    %v732 = vmul.f32 %v731, %v287
    %v733 = vadd.f32 %v732, %v288
    %v735 = vrot.slane %v671, 6
    %v737 = vmul.f32 %v733, %v735
    %739 = vrot.lane.b32.xlu0 %v733, 64
    %v740 = vpop.permute.xlu0 %739
    %v742 = vmul.f32 %v733, %v740
    %744 = vrot.lane.b32.xlu0 %v742, 32
    %v745 = vpop.permute.xlu0 %744
    %v747 = vadd.f32 %v737, %v745
    %v748 = vtanh.pop %v747
    %750 = vrot.lane.b32.xlu0 %v748, 64
    %v751 = vpop.permute.xlu0 %750
    %v753 = vmul.f32 %v733, %v751
    %v755 = vrot.slane %v753, 2
    %v757 = vmax.f32 %v678, %v755
    %v758 = vpack.c.bf16 %v753, %v753
    %v760 = vrot.slane %v758, 1
    %761 = vrot.lane.b32.xlu0 %v760, 32
    %v762 = vpop.permute.xlu0 %761
    %v764 = vsel %vm130, %v762, 0
    %766 = vmatprep.subr.bf16.mxu0 0
    %767 = vmatpush1.bf16.msra.mxu0 0
    %768 = vmatprep.subr.bf16.mxu0 0
    %769 = vmatpush1.bf16.msra.mxu0 0
    %770 = vmatprep.subr.bf16.mxu0 0
    %771 = vmatpush1.bf16.msra.mxu0 0
    %772 = vmatprep.subr.bf16.mxu0 0
    %773 = vmatpush1.bf16.msra.mxu0 0
    %774 = vmatprep.subr.bf16.mxu0 0
    %775 = vmatpush1.bf16.msra.mxu0 0
    %776 = vmatprep.subr.bf16.mxu0 0
    %777 = vmatpush1.bf16.msra.mxu0 0
    %778 = vmatprep.subr.bf16.mxu0 0
    %779 = vmatpush1.bf16.msra.mxu0 %v298
    %780 = vmatprep.subr.bf16.mxu0 0
    %781 = vmatpush1.bf16.msra.mxu0 %v297
    %782 = vmatprep.subr.bf16.mxu0 0
    %783 = vmatpush2.bf16.msra.mxu0 0
    %784 = vmatprep.subr.bf16.mxu0 0
    %785 = vmatpush2.bf16.msra.mxu0 0
    %786 = vmatprep.subr.bf16.mxu0 0
    %787 = vmatpush2.bf16.msra.mxu0 0
    %788 = vmatprep.subr.bf16.mxu0 0
    %789 = vmatpush2.bf16.msra.mxu0 0
    %790 = vmatprep.subr.bf16.mxu0 0
    %791 = vmatpush2.bf16.msra.mxu0 0
    %792 = vmatprep.subr.bf16.mxu0 0
    %793 = vmatpush2.bf16.msra.mxu0 0
    %794 = vmatprep.subr.bf16.mxu0 0
    %795 = vmatpush2.bf16.msra.mxu0 0
    %796 = vmatprep.subr.bf16.mxu0 0
    %797 = vmatpush2.bf16.msra.mxu0 0
    %798 = vmatprep.mubr.bf16.mxu0 0
    %799 = vmatmul.mubr.bf16.gmra.mxu0 %v764
    %v800 = vpop.f32.mrf.mxu0
    %v801 = vadd.f32 0.0, %v800
    %v802 = vpop.f32.mrf.mxu0
    %v803 = vpop.f32.mrf.mxu0
    %v804 = vpop.f32.mrf.mxu0
    %805 = vdwg.mxu0
    %v807 = vrot.slane %v801, 4
    %v809 = vadd.f32 %v279, %v807
    %v810 = vmul.f32 %v809, %v287
    %v811 = vtanh.pop %v810
    %v812 = vmul.f32 %v811, %v287
    %v813 = vadd.f32 %v812, %v288
    %v815 = vrot.slane %v747, 6
    %v817 = vmul.f32 %v813, %v815
    %819 = vrot.lane.b32.xlu0 %v813, 64
    %v820 = vpop.permute.xlu0 %819
    %v822 = vmul.f32 %v813, %v820
    %824 = vrot.lane.b32.xlu0 %v822, 32
    %v825 = vpop.permute.xlu0 %824
    %v827 = vadd.f32 %v817, %v825
    %v828 = vtanh.pop %v827
    %830 = vrot.lane.b32.xlu0 %v828, 64
    %v831 = vpop.permute.xlu0 %830
    %v833 = vmul.f32 %v813, %v831
    %v835 = vrot.slane %v833, 4
    %v837 = vmax.f32 %v757, %v835
    %v838 = vpack.c.bf16 %v833, %v833
    %v840 = vrot.slane %v838, 2
    %841 = vrot.lane.b32.xlu0 %v840, 32
    %v842 = vpop.permute.xlu0 %841
    %v844 = vsel %vm130, %v842, 0
    %846 = vmatprep.subr.bf16.mxu0 0
    %847 = vmatpush1.bf16.msra.mxu0 0
    %848 = vmatprep.subr.bf16.mxu0 0
    %849 = vmatpush1.bf16.msra.mxu0 0
    %850 = vmatprep.subr.bf16.mxu0 0
    %851 = vmatpush1.bf16.msra.mxu0 0
    %852 = vmatprep.subr.bf16.mxu0 0
    %853 = vmatpush1.bf16.msra.mxu0 0
    %854 = vmatprep.subr.bf16.mxu0 0
    %855 = vmatpush1.bf16.msra.mxu0 0
    %856 = vmatprep.subr.bf16.mxu0 0
    %857 = vmatpush1.bf16.msra.mxu0 0
    %858 = vmatprep.subr.bf16.mxu0 0
    %859 = vmatpush1.bf16.msra.mxu0 %v298
    %860 = vmatprep.subr.bf16.mxu0 0
    %861 = vmatpush1.bf16.msra.mxu0 %v297
    %862 = vmatprep.subr.bf16.mxu0 0
    %863 = vmatpush2.bf16.msra.mxu0 0
    %864 = vmatprep.subr.bf16.mxu0 0
    %865 = vmatpush2.bf16.msra.mxu0 0
    %866 = vmatprep.subr.bf16.mxu0 0
    %867 = vmatpush2.bf16.msra.mxu0 0
    %868 = vmatprep.subr.bf16.mxu0 0
    %869 = vmatpush2.bf16.msra.mxu0 0
    %870 = vmatprep.subr.bf16.mxu0 0
    %871 = vmatpush2.bf16.msra.mxu0 0
    %872 = vmatprep.subr.bf16.mxu0 0
    %873 = vmatpush2.bf16.msra.mxu0 0
    %874 = vmatprep.subr.bf16.mxu0 0
    %875 = vmatpush2.bf16.msra.mxu0 0
    %876 = vmatprep.subr.bf16.mxu0 0
    %877 = vmatpush2.bf16.msra.mxu0 0
    %878 = vmatprep.mubr.bf16.mxu0 0
    %879 = vmatmul.mubr.bf16.gmra.mxu0 %v844
    %v880 = vpop.f32.mrf.mxu0
    %v881 = vadd.f32 0.0, %v880
    %v882 = vpop.f32.mrf.mxu0
    %v883 = vpop.f32.mrf.mxu0
    %v884 = vpop.f32.mrf.mxu0
    %885 = vdwg.mxu0
    %v887 = vrot.slane %v881, 2
    %v889 = vadd.f32 %v279, %v887
    %v890 = vmul.f32 %v889, %v287
    %v891 = vtanh.pop %v890
    %v892 = vmul.f32 %v891, %v287
    %v893 = vadd.f32 %v892, %v288
    %v895 = vrot.slane %v827, 6
    %v897 = vmul.f32 %v893, %v895
    %899 = vrot.lane.b32.xlu0 %v893, 64
    %v900 = vpop.permute.xlu0 %899
    %v902 = vmul.f32 %v893, %v900
    %904 = vrot.lane.b32.xlu0 %v902, 32
    %v905 = vpop.permute.xlu0 %904
    %v907 = vadd.f32 %v897, %v905
    %v908 = vtanh.pop %v907
    %910 = vrot.lane.b32.xlu0 %v908, 64
    %v911 = vpop.permute.xlu0 %910
    %v913 = vmul.f32 %v893, %v911
    %v915 = vrot.slane %v913, 6
    %v917 = vmax.f32 %v837, %v915
    %v918 = vtanh.pop %v917
    %v919 = vtanh.pop %v918
    %v920 = vpack.c.bf16 %v919, %v919
    %v922 = vlaneseq
    %v923 = vshrl.u32 %v922, 7
    %v924 = vsub.s32 0, %v923
    %v925 = vrot.slane %v109, %v924
    %928 = vrot.lane.b32.xlu0 %v920, 32
    %v929 = vpop.permute.xlu0 %928
    %v934 = vunpack.c.l.b16 %v102
    %v935 = vunpack.c.l.b16 %v103
    %v936 = vunpack.c.l.b16 %v104
    %v937 = vunpack.c.l.b16 %v105
    %v938 = vpack.c.b16 %v935, %v934
    %v939 = vpack.c.b16 %v937, %v936
    %v943 = vsel %vm130, %v929, 0
    %945 = vmatprep.subr.bf16.mxu0 0
    %946 = vmatpush1.bf16.msra.mxu0 0
    %947 = vmatprep.subr.bf16.mxu0 0
    %948 = vmatpush1.bf16.msra.mxu0 0
    %949 = vmatprep.subr.bf16.mxu0 0
    %950 = vmatpush1.bf16.msra.mxu0 0
    %951 = vmatprep.subr.bf16.mxu0 0
    %952 = vmatpush1.bf16.msra.mxu0 0
    %953 = vmatprep.subr.bf16.mxu0 0
    %954 = vmatpush1.bf16.msra.mxu0 0
    %955 = vmatprep.subr.bf16.mxu0 0
    %956 = vmatpush1.bf16.msra.mxu0 0
    %957 = vmatprep.subr.bf16.mxu0 0
    %958 = vmatpush1.bf16.msra.mxu0 %v939
    %959 = vmatprep.subr.bf16.mxu0 0
    %960 = vmatpush1.bf16.msra.mxu0 %v938
    %961 = vmatprep.subr.bf16.mxu0 0
    %962 = vmatpush2.bf16.msra.mxu0 0
    %963 = vmatprep.subr.bf16.mxu0 0
    %964 = vmatpush2.bf16.msra.mxu0 0
    %965 = vmatprep.subr.bf16.mxu0 0
    %966 = vmatpush2.bf16.msra.mxu0 0
    %967 = vmatprep.subr.bf16.mxu0 0
    %968 = vmatpush2.bf16.msra.mxu0 0
    %969 = vmatprep.subr.bf16.mxu0 0
    %970 = vmatpush2.bf16.msra.mxu0 0
    %971 = vmatprep.subr.bf16.mxu0 0
    %972 = vmatpush2.bf16.msra.mxu0 0
    %973 = vmatprep.subr.bf16.mxu0 0
    %974 = vmatpush2.bf16.msra.mxu0 0
    %975 = vmatprep.subr.bf16.mxu0 0
    %976 = vmatpush2.bf16.msra.mxu0 0
    %977 = vmatprep.mubr.bf16.mxu0 0
    %978 = vmatmul.mubr.bf16.gmra.mxu0 %v943
    %v979 = vpop.f32.mrf.mxu0
    %v980 = vadd.f32 %v925, %v979
    %v981 = vpop.f32.mrf.mxu0
    %v982 = vpop.f32.mrf.mxu0
    %v983 = vpop.f32.mrf.mxu0
    %984 = vdwg.mxu0
    %vm985 = vcmask 25600
    %v986 = vsel %vm985, %v980, -inf
    %987 = vmax.xlane.f32.xlu0 %v986
    %v988 = vpop.xlane.xlu0 %987
    %v989 = vsub.f32 %v980, %v988
    %v990 = vmul.f32 %v989, 1.442695
    %v991 = vpow.pop %v990
    %v992 = vsel %vm985, %v991, 0.0
    %993 = vadd.xlane.f32.xlu0 %v992
    %v994 = vpop.xlane.xlu0 %993
    %v995 = vrcp.pop %v994
    %v996 = vmul.f32 %v991, %v995
    %997 = vst.msk [vmem:[#allocation5] sm:$0x3] %vm985, %v996
    // Predicated region
    $region14: #{tpu_custom_call.1} parent=1 // pred_check
      _
    $region15: #{tpu_custom_call.1} parent=1 // pred_check_branch
      %999 = sbr.rel (0) target = $region17
    $region16: #{tpu_custom_call.1} parent=1 // pred_region
      %s1001 = ssub.s32 32, 32
      %1002 = vsyncadd [#allocation6], %s1001
      %s1004 = sshll.u32 [#allocation5], 4
      %s1005 = int_to_ptr.vmem [resolvable:$true] %s1004
      %1007 = dma.vmem_to_hbm [thread:$0]  %s1005, 32, %s4, [#allocation6]
    $region17: #{tpu_custom_call.1} parent=1 // pred_fallthru
      _
    // Predicated region
    $region18: #{tpu_custom_call.1} parent=1 // pred_check
      _
    $region19: #{tpu_custom_call.1} parent=1 // pred_check_branch
      %1009 = sbr.rel (0) target = $region21
    $region20: #{tpu_custom_call.1} parent=1 // pred_region
      %1010 = dma.done [#allocation6], 32
    $region21: #{tpu_custom_call.1} parent=1 // pred_fallthru
      _
    %1011 = vsyncpa [#allocation6], 1

</llo_original>
